<compile_context>
chip_gen: v6e
topology: v6e:2x2x1
jax: 0.10.0
libtpu: 0.0.40
codegen_flags: <defaults>
</compile_context>

<pallas_src>
import math

import jax
import jax.numpy as jnp
from jax import lax
from jax.experimental import pallas as pl
from jax.experimental.pallas import tpu as pltpu


# ----------------------------- config ---------------------------------------
B = 2          # batch
T = 8          # sequence length (block size)
C = 32         # n_embd
NH = 4         # n_head
HD = C // NH   # head dim
EPS = 1e-5

# Finite, dtype-derived mask fill (stays finite after subtracting the row max).
MASK_BIAS = float(jnp.finfo(jnp.float32).min) / 2


# ----------------------------- helpers ---------------------------------------
def _layernorm(h, gamma, beta):
    # gamma/beta are (1, C); broadcast over rows. All f32.
    mean = jnp.mean(h, axis=-1, keepdims=True)
    cent = h - mean
    var = jnp.mean(cent * cent, axis=-1, keepdims=True)
    return cent * lax.rsqrt(var + EPS) * gamma + beta


def _gelu_tanh(x):
    # GPT-2 "new gelu" (tanh approximation).
    # TODO(synk): nn.GELU() default is the exact erf form; tanh approx matches
    # the original GPT-2 formulation and differs only at ~1e-3 level.
    c = math.sqrt(2.0 / math.pi)
    return 0.5 * x * (1.0 + jnp.tanh(c * (x + 0.044715 * x * x * x)))


# ----------------------------- kernel ---------------------------------------
def block_kernel(
    x_ref,                       # (B*T, C)   batch flattened into M dim, f32
    ln1_g_ref, ln1_b_ref,        # (1, C) f32
    wqkv_ref, bqkv_ref,          # (C, 3C) bf16, (1, 3C) f32  (Q cols pre-scaled by 1/sqrt(HD))
    wproj_ref, bproj_ref,        # (C, C) bf16,  (1, C) f32
    ln2_g_ref, ln2_b_ref,        # (1, C) f32
    wfc_ref, bfc_ref,            # (C, 4C) bf16, (1, 4C) f32
    wfc2_ref, bfc2_ref,          # (4C, C) bf16, (1, C) f32
    o_ref,                       # (B*T, C) f32
    y_sc,                        # VMEM scratch (B*T, C) f32: attention-proj slab
):
    x = x_ref[...]                                       # (B*T, C) f32

    # ---- ln_1 + fused qkv projection (bf16 MXU operands, f32 accumulate) ----
    h = _layernorm(x, ln1_g_ref[...], ln1_b_ref[...])
    qkv = jnp.dot(h.astype(jnp.bfloat16), wqkv_ref[...],
                  preferred_element_type=jnp.float32) + bqkv_ref[...]   # (B*T, 3C) f32

    # Causal mask: static for fixed T, computed once per invocation.
    rows = lax.broadcasted_iota(jnp.int32, (T, T), 0)
    cols = lax.broadcasted_iota(jnp.int32, (T, T), 1)
    causal = cols <= rows                                # (T, T) bool

    # Slices stay on the f32 (8,128)-tiled layout; casts to bf16 happen on the
    # tiny (T, HD) tiles right before each MXU op.
    def qkv_slice(r0, c0):
        return qkv[r0:r0 + T, c0:c0 + HD].astype(jnp.bfloat16)   # (T, HD) bf16

    # ---- Phase 1: issue all q @ k^T score dots (no dependent softmax yet) ----
    scores = []                                          # b-major, h-minor
    for b in range(B):
        r0 = b * T
        for hh in range(NH):
            c0 = hh * HD
            q = qkv_slice(r0, c0)            # pre-scaled by 1/sqrt(HD)
            k = qkv_slice(r0, C + c0)
            scores.append(
                lax.dot_general(q, k, (((1,), (1,)), ((), ())),
                                preferred_element_type=jnp.float32))    # (T, T) f32

    # ---- Phase 2: masked softmax over all score tiles (f32 elementwise) ----
    probs = []
    for s in scores:
        s = jnp.where(causal, s, jnp.float32(MASK_BIAS))
        s = s - jnp.max(s, axis=-1, keepdims=True)
        p = jnp.exp(s)
        p = p * pl.reciprocal(jnp.sum(p, axis=-1, keepdims=True), approx=True)
        probs.append(p.astype(jnp.bfloat16))

    # ---- Phase 3: p @ v, accumulated directly into the output projection ----
    # No head concat: each head contributes (p_h @ v_h) @ Wproj[h*HD:(h+1)*HD, :]
    # to a per-batch (T, C) f32 accumulator, stored into the scratch slab at a
    # static row offset (no batch-row concat either).
    wproj = wproj_ref[...]                               # (C, C) bf16
    for b in range(B):
        r0 = b * T
        acc = None
        for hh in range(NH):
            c0 = hh * HD
            v = qkv_slice(r0, 2 * C + c0)                              # (T, HD) bf16
            pv = jnp.dot(probs[b * NH + hh], v,
                         preferred_element_type=jnp.float32)           # (T, HD) f32
            contrib = jnp.dot(pv.astype(jnp.bfloat16), wproj[c0:c0 + HD, :],
                              preferred_element_type=jnp.float32)      # (T, C) f32
            acc = contrib if acc is None else acc + contrib
        y_sc[r0:r0 + T, :] = acc

    x = x + y_sc[...] + bproj_ref[...]                   # residual 1 (+ proj bias)

    # ---- ln_2 + MLP (bf16 MXU operands, f32 elementwise) ----
    h2 = _layernorm(x, ln2_g_ref[...], ln2_b_ref[...])
    h2 = jnp.dot(h2.astype(jnp.bfloat16), wfc_ref[...],
                 preferred_element_type=jnp.float32) + bfc_ref[...]     # (B*T, 4C) f32
    h2 = _gelu_tanh(h2)
    h2 = jnp.dot(h2.astype(jnp.bfloat16), wfc2_ref[...],
                 preferred_element_type=jnp.float32) + bfc2_ref[...]    # (B*T, C) f32

    o_ref[...] = (x + h2).astype(o_ref.dtype)            # residual 2


# ----------------------------- wrapper ---------------------------------------
def prepare_params(params):
    """One-time parameter prep for the kernel:
      * fold 1/sqrt(HD) into the Q columns of W_qkv / b_qkv,
      * cast the four weight matrices to bf16 (MXU-native on v6e/v7x, halves
        weight VMEM).  Biases and LayerNorm params stay f32 (elementwise path).
    """
    (ln1_g, ln1_b, wqkv, bqkv, wproj, bproj,
     ln2_g, ln2_b, wfc, bfc, wfc2, bfc2) = params
    scale = jnp.concatenate(
        [jnp.full((C,), 1.0 / math.sqrt(HD), jnp.float32),
         jnp.ones((2 * C,), jnp.float32)])[None, :]          # (1, 3C)
    return (ln1_g, ln1_b,
            (wqkv * scale).astype(jnp.bfloat16), bqkv * scale,
            wproj.astype(jnp.bfloat16), bproj,
            ln2_g, ln2_b,
            wfc.astype(jnp.bfloat16), bfc,
            wfc2.astype(jnp.bfloat16), bfc2)


@jax.jit
def gpt2_block(x, params):
    """x: (B, T, C) f32. `params` must be pre-processed with prepare_params."""
    x2 = x.reshape(B * T, C)     # free contiguous reshape in XLA
    out = pl.pallas_call(
        block_kernel,
        out_shape=jax.ShapeDtypeStruct((B * T, C), x.dtype),
        scratch_shapes=[pltpu.VMEM((B * T, C), jnp.float32)],
        # No grid: single invocation, everything resident in VMEM once
        # (no per-step overhead, no redundant double-buffered weights).
    )(x2, *params)
    return out.reshape(B, T, C)


# ----------------------------- reference (pure JAX, f32) ----------------------
def gpt2_block_ref(x, params):
    (ln1_g, ln1_b, wqkv, bqkv, wproj, bproj,
     ln2_g, ln2_b, wfc, bfc, wfc2, bfc2) = params

    def ln(h, g, b):
        m = h.mean(-1, keepdims=True)
        v = ((h - m) ** 2).mean(-1, keepdims=True)
        return (h - m) / jnp.sqrt(v + EPS) * g + b

    h = ln(x, ln1_g[0], ln1_b[0])
    qkv = h @ wqkv + bqkv[0]
    q, k, v = jnp.split(qkv, 3, axis=-1)
    q = q.reshape(B, T, NH, HD)
    k = k.reshape(B, T, NH, HD)
    v = v.reshape(B, T, NH, HD)
    att = jnp.einsum("bqhd,bkhd->bhqk", q, k) / math.sqrt(HD)
    mask = jnp.tril(jnp.ones((T, T), bool))
    att = jnp.where(mask[None, None], att, -1e30)
    att = jax.nn.softmax(att, axis=-1)
    y = jnp.einsum("bhqk,bkhd->bqhd", att, v).reshape(B, T, C)
    x = x + (y @ wproj + bproj[0])

    h2 = ln(x, ln2_g[0], ln2_b[0])
    h2 = h2 @ wfc + bfc[0]
    c = math.sqrt(2.0 / math.pi)
    h2 = 0.5 * h2 * (1.0 + jnp.tanh(c * (h2 + 0.044715 * h2 ** 3)))
    h2 = h2 @ wfc2 + bfc2[0]
    return x + h2


# ----------------------------- main ------------------------------------------
if __name__ == "__main__":
    key = jax.random.PRNGKey(0)
    ks = jax.random.split(key, 8)

    x = jax.random.normal(ks[0], (B, T, C), jnp.float32)

    std = 0.02
    params = (
        jnp.ones((1, C), jnp.float32),                                    # ln1 gamma
        jnp.zeros((1, C), jnp.float32),                                   # ln1 beta
        jax.random.normal(ks[1], (C, 3 * C), jnp.float32) * std,          # W_qkv
        jnp.zeros((1, 3 * C), jnp.float32),                               # b_qkv
        jax.random.normal(ks[2], (C, C), jnp.float32) * std,              # W_proj
        jnp.zeros((1, C), jnp.float32),                                   # b_proj
        jnp.ones((1, C), jnp.float32),                                    # ln2 gamma
        jnp.zeros((1, C), jnp.float32),                                   # ln2 beta
        jax.random.normal(ks[3], (C, 4 * C), jnp.float32) * std,          # W_fc
        jnp.zeros((1, 4 * C), jnp.float32),                               # b_fc
        jax.random.normal(ks[4], (4 * C, C), jnp.float32) * std,          # W_fc_proj
        jnp.zeros((1, C), jnp.float32),                                   # b_fc_proj
    )

    # One-time fold of attention scale + bf16 weight cast for the kernel.
    kernel_params = prepare_params(params)

    out = gpt2_block(x, kernel_params)
    jax.block_until_ready(out)

    ref = gpt2_block_ref(x, params)   # pure f32 reference
    # Tolerance accounts for bf16 MXU operands and approx reciprocal.
    assert jnp.allclose(out, ref, atol=1e-2, rtol=1e-2), "mismatch vs reference"

    print("KERNEL_OK")
</pallas_src>

<mosaic_0001>
module attributes {stable_mosaic.version = 11 : i64} {
  func.func @block_kernel(%arg0: memref<16x32xf32, #tpu.memory_space<vmem>>, %arg1: memref<1x32xf32, #tpu.memory_space<vmem>>, %arg2: memref<1x32xf32, #tpu.memory_space<vmem>>, %arg3: memref<32x96xbf16, #tpu.memory_space<vmem>>, %arg4: memref<1x96xf32, #tpu.memory_space<vmem>>, %arg5: memref<32x32xbf16, #tpu.memory_space<vmem>>, %arg6: memref<1x32xf32, #tpu.memory_space<vmem>>, %arg7: memref<1x32xf32, #tpu.memory_space<vmem>>, %arg8: memref<1x32xf32, #tpu.memory_space<vmem>>, %arg9: memref<32x128xbf16, #tpu.memory_space<vmem>>, %arg10: memref<1x128xf32, #tpu.memory_space<vmem>>, %arg11: memref<128x32xbf16, #tpu.memory_space<vmem>>, %arg12: memref<1x32xf32, #tpu.memory_space<vmem>>, %arg13: memref<16x32xf32, #tpu.memory_space<vmem>>, %arg14: memref<16x32xf32, #tpu.memory_space<vmem>>) attributes {dimension_semantics = [], scalar_prefetch = 0 : i64, scratch_operands = 1 : i64, tpu.core_type = #tpu.core_type<tc>} {
    %c0 = arith.constant 0 : index
    %c0_0 = arith.constant 0 : index
    %0 = vector.load %arg0[%c0, %c0_0] : memref<16x32xf32, #tpu.memory_space<vmem>>, vector<16x32xf32>
    %c0_1 = arith.constant 0 : index
    %c0_2 = arith.constant 0 : index
    %1 = vector.load %arg1[%c0_1, %c0_2] : memref<1x32xf32, #tpu.memory_space<vmem>>, vector<1x32xf32>
    %c0_3 = arith.constant 0 : index
    %c0_4 = arith.constant 0 : index
    %2 = vector.load %arg2[%c0_3, %c0_4] : memref<1x32xf32, #tpu.memory_space<vmem>>, vector<1x32xf32>
    %cst = arith.constant dense<0.000000e+00> : vector<16xf32>
    %3 = vector.multi_reduction <add>, %0, %cst [1] : vector<16x32xf32> to vector<16xf32>
    %4 = vector.shape_cast %3 : vector<16xf32> to vector<16x1xf32>
    %cst_5 = arith.constant 3.200000e+01 : f32
    %5 = vector.broadcast %cst_5 : f32 to vector<16x1xf32>
    %6 = arith.divf %4, %5 : vector<16x1xf32>
    %7 = vector.broadcast %6 : vector<16x1xf32> to vector<16x32xf32>
    %8 = arith.subf %0, %7 : vector<16x32xf32>
    %9 = arith.mulf %8, %8 : vector<16x32xf32>
    %cst_6 = arith.constant dense<0.000000e+00> : vector<16xf32>
    %10 = vector.multi_reduction <add>, %9, %cst_6 [1] : vector<16x32xf32> to vector<16xf32>
    %11 = vector.shape_cast %10 : vector<16xf32> to vector<16x1xf32>
    %cst_7 = arith.constant 3.200000e+01 : f32
    %12 = vector.broadcast %cst_7 : f32 to vector<16x1xf32>
    %13 = arith.divf %11, %12 : vector<16x1xf32>
    %cst_8 = arith.constant 9.99999974E-6 : f32
    %14 = vector.broadcast %cst_8 : f32 to vector<16x1xf32>
    %15 = arith.addf %13, %14 : vector<16x1xf32>
    %16 = math.rsqrt %15 : vector<16x1xf32>
    %17 = vector.broadcast %16 : vector<16x1xf32> to vector<16x32xf32>
    %18 = arith.mulf %8, %17 : vector<16x32xf32>
    %19 = vector.broadcast %1 : vector<1x32xf32> to vector<16x32xf32>
    %20 = arith.mulf %18, %19 : vector<16x32xf32>
    %21 = vector.broadcast %2 : vector<1x32xf32> to vector<16x32xf32>
    %22 = arith.addf %20, %21 : vector<16x32xf32>
    %23 = arith.truncf %22 : vector<16x32xf32> to vector<16x32xbf16>
    %c0_9 = arith.constant 0 : index
    %c0_10 = arith.constant 0 : index
    %24 = vector.load %arg3[%c0_9, %c0_10] : memref<32x96xbf16, #tpu.memory_space<vmem>>, vector<32x96xbf16>
    %cst_11 = arith.constant dense<0.000000e+00> : vector<16x96xf32>
    %25 = tpu.matmul %23, %24, %cst_11 {dimension_numbers = #tpu.dot_dimension_numbers<[1], [0], [0], [1], [0, 0, 1, 1], [], []>} : vector<16x32xbf16>, vector<32x96xbf16>, vector<16x96xf32> -> vector<16x96xf32>
    %c0_12 = arith.constant 0 : index
    %c0_13 = arith.constant 0 : index
    %26 = vector.load %arg4[%c0_12, %c0_13] : memref<1x96xf32, #tpu.memory_space<vmem>>, vector<1x96xf32>
    %27 = vector.broadcast %26 : vector<1x96xf32> to vector<16x96xf32>
    %28 = arith.addf %25, %27 : vector<16x96xf32>
    %29 = tpu.iota {dimensions = array<i32: 0>} : vector<8x8xi32>
    %30 = tpu.iota {dimensions = array<i32: 1>} : vector<8x8xi32>
    %31 = arith.cmpi sle, %30, %29 : vector<8x8xi32>
    %32 = vector.extract_strided_slice %28 {offsets = [0, 0], sizes = [8, 8], strides = [1, 1]} : vector<16x96xf32> to vector<8x8xf32>
    %33 = arith.truncf %32 : vector<8x8xf32> to vector<8x8xbf16>
    %34 = vector.extract_strided_slice %28 {offsets = [0, 32], sizes = [8, 8], strides = [1, 1]} : vector<16x96xf32> to vector<8x8xf32>
    %35 = arith.truncf %34 : vector<8x8xf32> to vector<8x8xbf16>
    %cst_14 = arith.constant dense<0.000000e+00> : vector<8x8xf32>
    %36 = tpu.matmul %33, %35, %cst_14 {dimension_numbers = #tpu.dot_dimension_numbers<[1], [1], [0], [0], [0, 0, 1, 0], [], []>} : vector<8x8xbf16>, vector<8x8xbf16>, vector<8x8xf32> -> vector<8x8xf32>
    %37 = vector.extract_strided_slice %28 {offsets = [0, 8], sizes = [8, 8], strides = [1, 1]} : vector<16x96xf32> to vector<8x8xf32>
    %38 = arith.truncf %37 : vector<8x8xf32> to vector<8x8xbf16>
    %39 = vector.extract_strided_slice %28 {offsets = [0, 40], sizes = [8, 8], strides = [1, 1]} : vector<16x96xf32> to vector<8x8xf32>
    %40 = arith.truncf %39 : vector<8x8xf32> to vector<8x8xbf16>
    %cst_15 = arith.constant dense<0.000000e+00> : vector<8x8xf32>
    %41 = tpu.matmul %38, %40, %cst_15 {dimension_numbers = #tpu.dot_dimension_numbers<[1], [1], [0], [0], [0, 0, 1, 0], [], []>} : vector<8x8xbf16>, vector<8x8xbf16>, vector<8x8xf32> -> vector<8x8xf32>
    %42 = vector.extract_strided_slice %28 {offsets = [0, 16], sizes = [8, 8], strides = [1, 1]} : vector<16x96xf32> to vector<8x8xf32>
    %43 = arith.truncf %42 : vector<8x8xf32> to vector<8x8xbf16>
    %44 = vector.extract_strided_slice %28 {offsets = [0, 48], sizes = [8, 8], strides = [1, 1]} : vector<16x96xf32> to vector<8x8xf32>
    %45 = arith.truncf %44 : vector<8x8xf32> to vector<8x8xbf16>
    %cst_16 = arith.constant dense<0.000000e+00> : vector<8x8xf32>
    %46 = tpu.matmul %43, %45, %cst_16 {dimension_numbers = #tpu.dot_dimension_numbers<[1], [1], [0], [0], [0, 0, 1, 0], [], []>} : vector<8x8xbf16>, vector<8x8xbf16>, vector<8x8xf32> -> vector<8x8xf32>
    %47 = vector.extract_strided_slice %28 {offsets = [0, 24], sizes = [8, 8], strides = [1, 1]} : vector<16x96xf32> to vector<8x8xf32>
    %48 = arith.truncf %47 : vector<8x8xf32> to vector<8x8xbf16>
    %49 = vector.extract_strided_slice %28 {offsets = [0, 56], sizes = [8, 8], strides = [1, 1]} : vector<16x96xf32> to vector<8x8xf32>
    %50 = arith.truncf %49 : vector<8x8xf32> to vector<8x8xbf16>
    %cst_17 = arith.constant dense<0.000000e+00> : vector<8x8xf32>
    %51 = tpu.matmul %48, %50, %cst_17 {dimension_numbers = #tpu.dot_dimension_numbers<[1], [1], [0], [0], [0, 0, 1, 0], [], []>} : vector<8x8xbf16>, vector<8x8xbf16>, vector<8x8xf32> -> vector<8x8xf32>
    %52 = vector.extract_strided_slice %28 {offsets = [8, 0], sizes = [8, 8], strides = [1, 1]} : vector<16x96xf32> to vector<8x8xf32>
    %53 = arith.truncf %52 : vector<8x8xf32> to vector<8x8xbf16>
    %54 = vector.extract_strided_slice %28 {offsets = [8, 32], sizes = [8, 8], strides = [1, 1]} : vector<16x96xf32> to vector<8x8xf32>
    %55 = arith.truncf %54 : vector<8x8xf32> to vector<8x8xbf16>
    %cst_18 = arith.constant dense<0.000000e+00> : vector<8x8xf32>
    %56 = tpu.matmul %53, %55, %cst_18 {dimension_numbers = #tpu.dot_dimension_numbers<[1], [1], [0], [0], [0, 0, 1, 0], [], []>} : vector<8x8xbf16>, vector<8x8xbf16>, vector<8x8xf32> -> vector<8x8xf32>
    %57 = vector.extract_strided_slice %28 {offsets = [8, 8], sizes = [8, 8], strides = [1, 1]} : vector<16x96xf32> to vector<8x8xf32>
    %58 = arith.truncf %57 : vector<8x8xf32> to vector<8x8xbf16>
    %59 = vector.extract_strided_slice %28 {offsets = [8, 40], sizes = [8, 8], strides = [1, 1]} : vector<16x96xf32> to vector<8x8xf32>
    %60 = arith.truncf %59 : vector<8x8xf32> to vector<8x8xbf16>
    %cst_19 = arith.constant dense<0.000000e+00> : vector<8x8xf32>
    %61 = tpu.matmul %58, %60, %cst_19 {dimension_numbers = #tpu.dot_dimension_numbers<[1], [1], [0], [0], [0, 0, 1, 0], [], []>} : vector<8x8xbf16>, vector<8x8xbf16>, vector<8x8xf32> -> vector<8x8xf32>
    %62 = vector.extract_strided_slice %28 {offsets = [8, 16], sizes = [8, 8], strides = [1, 1]} : vector<16x96xf32> to vector<8x8xf32>
    %63 = arith.truncf %62 : vector<8x8xf32> to vector<8x8xbf16>
    %64 = vector.extract_strided_slice %28 {offsets = [8, 48], sizes = [8, 8], strides = [1, 1]} : vector<16x96xf32> to vector<8x8xf32>
    %65 = arith.truncf %64 : vector<8x8xf32> to vector<8x8xbf16>
    %cst_20 = arith.constant dense<0.000000e+00> : vector<8x8xf32>
    %66 = tpu.matmul %63, %65, %cst_20 {dimension_numbers = #tpu.dot_dimension_numbers<[1], [1], [0], [0], [0, 0, 1, 0], [], []>} : vector<8x8xbf16>, vector<8x8xbf16>, vector<8x8xf32> -> vector<8x8xf32>
    %67 = vector.extract_strided_slice %28 {offsets = [8, 24], sizes = [8, 8], strides = [1, 1]} : vector<16x96xf32> to vector<8x8xf32>
    %68 = arith.truncf %67 : vector<8x8xf32> to vector<8x8xbf16>
    %69 = vector.extract_strided_slice %28 {offsets = [8, 56], sizes = [8, 8], strides = [1, 1]} : vector<16x96xf32> to vector<8x8xf32>
    %70 = arith.truncf %69 : vector<8x8xf32> to vector<8x8xbf16>
    %cst_21 = arith.constant dense<0.000000e+00> : vector<8x8xf32>
    %71 = tpu.matmul %68, %70, %cst_21 {dimension_numbers = #tpu.dot_dimension_numbers<[1], [1], [0], [0], [0, 0, 1, 0], [], []>} : vector<8x8xbf16>, vector<8x8xbf16>, vector<8x8xf32> -> vector<8x8xf32>
    %cst_22 = arith.constant -1.70141173E+38 : f32
    %72 = vector.broadcast %cst_22 : f32 to vector<8x8xf32>
    %73 = arith.select %31, %36, %72 : vector<8x8xi1>, vector<8x8xf32>
    %cst_23 = arith.constant dense<0xFF800000> : vector<8xf32>
    %74 = vector.multi_reduction <maximumf>, %73, %cst_23 [1] : vector<8x8xf32> to vector<8xf32>
    %75 = vector.shape_cast %74 : vector<8xf32> to vector<8x1xf32>
    %76 = vector.broadcast %75 : vector<8x1xf32> to vector<8x8xf32>
    %77 = arith.subf %73, %76 : vector<8x8xf32>
    %78 = math.exp %77 : vector<8x8xf32>
    %cst_24 = arith.constant dense<0.000000e+00> : vector<8xf32>
    %79 = vector.multi_reduction <add>, %78, %cst_24 [1] : vector<8x8xf32> to vector<8xf32>
    %80 = vector.shape_cast %79 : vector<8xf32> to vector<8x1xf32>
    %81 = tpu.reciprocal %80 {approx = true} : vector<8x1xf32> -> vector<8x1xf32>
    %82 = vector.broadcast %81 : vector<8x1xf32> to vector<8x8xf32>
    %83 = arith.mulf %78, %82 : vector<8x8xf32>
    %84 = arith.truncf %83 : vector<8x8xf32> to vector<8x8xbf16>
    %cst_25 = arith.constant -1.70141173E+38 : f32
    %85 = vector.broadcast %cst_25 : f32 to vector<8x8xf32>
    %86 = arith.select %31, %41, %85 : vector<8x8xi1>, vector<8x8xf32>
    %cst_26 = arith.constant dense<0xFF800000> : vector<8xf32>
    %87 = vector.multi_reduction <maximumf>, %86, %cst_26 [1] : vector<8x8xf32> to vector<8xf32>
    %88 = vector.shape_cast %87 : vector<8xf32> to vector<8x1xf32>
    %89 = vector.broadcast %88 : vector<8x1xf32> to vector<8x8xf32>
    %90 = arith.subf %86, %89 : vector<8x8xf32>
    %91 = math.exp %90 : vector<8x8xf32>
    %cst_27 = arith.constant dense<0.000000e+00> : vector<8xf32>
    %92 = vector.multi_reduction <add>, %91, %cst_27 [1] : vector<8x8xf32> to vector<8xf32>
    %93 = vector.shape_cast %92 : vector<8xf32> to vector<8x1xf32>
    %94 = tpu.reciprocal %93 {approx = true} : vector<8x1xf32> -> vector<8x1xf32>
    %95 = vector.broadcast %94 : vector<8x1xf32> to vector<8x8xf32>
    %96 = arith.mulf %91, %95 : vector<8x8xf32>
    %97 = arith.truncf %96 : vector<8x8xf32> to vector<8x8xbf16>
    %cst_28 = arith.constant -1.70141173E+38 : f32
    %98 = vector.broadcast %cst_28 : f32 to vector<8x8xf32>
    %99 = arith.select %31, %46, %98 : vector<8x8xi1>, vector<8x8xf32>
    %cst_29 = arith.constant dense<0xFF800000> : vector<8xf32>
    %100 = vector.multi_reduction <maximumf>, %99, %cst_29 [1] : vector<8x8xf32> to vector<8xf32>
    %101 = vector.shape_cast %100 : vector<8xf32> to vector<8x1xf32>
    %102 = vector.broadcast %101 : vector<8x1xf32> to vector<8x8xf32>
    %103 = arith.subf %99, %102 : vector<8x8xf32>
    %104 = math.exp %103 : vector<8x8xf32>
    %cst_30 = arith.constant dense<0.000000e+00> : vector<8xf32>
    %105 = vector.multi_reduction <add>, %104, %cst_30 [1] : vector<8x8xf32> to vector<8xf32>
    %106 = vector.shape_cast %105 : vector<8xf32> to vector<8x1xf32>
    %107 = tpu.reciprocal %106 {approx = true} : vector<8x1xf32> -> vector<8x1xf32>
    %108 = vector.broadcast %107 : vector<8x1xf32> to vector<8x8xf32>
    %109 = arith.mulf %104, %108 : vector<8x8xf32>
    %110 = arith.truncf %109 : vector<8x8xf32> to vector<8x8xbf16>
    %cst_31 = arith.constant -1.70141173E+38 : f32
    %111 = vector.broadcast %cst_31 : f32 to vector<8x8xf32>
    %112 = arith.select %31, %51, %111 : vector<8x8xi1>, vector<8x8xf32>
    %cst_32 = arith.constant dense<0xFF800000> : vector<8xf32>
    %113 = vector.multi_reduction <maximumf>, %112, %cst_32 [1] : vector<8x8xf32> to vector<8xf32>
    %114 = vector.shape_cast %113 : vector<8xf32> to vector<8x1xf32>
    %115 = vector.broadcast %114 : vector<8x1xf32> to vector<8x8xf32>
    %116 = arith.subf %112, %115 : vector<8x8xf32>
    %117 = math.exp %116 : vector<8x8xf32>
    %cst_33 = arith.constant dense<0.000000e+00> : vector<8xf32>
    %118 = vector.multi_reduction <add>, %117, %cst_33 [1] : vector<8x8xf32> to vector<8xf32>
    %119 = vector.shape_cast %118 : vector<8xf32> to vector<8x1xf32>
    %120 = tpu.reciprocal %119 {approx = true} : vector<8x1xf32> -> vector<8x1xf32>
    %121 = vector.broadcast %120 : vector<8x1xf32> to vector<8x8xf32>
    %122 = arith.mulf %117, %121 : vector<8x8xf32>
    %123 = arith.truncf %122 : vector<8x8xf32> to vector<8x8xbf16>
    %cst_34 = arith.constant -1.70141173E+38 : f32
    %124 = vector.broadcast %cst_34 : f32 to vector<8x8xf32>
    %125 = arith.select %31, %56, %124 : vector<8x8xi1>, vector<8x8xf32>
    %cst_35 = arith.constant dense<0xFF800000> : vector<8xf32>
    %126 = vector.multi_reduction <maximumf>, %125, %cst_35 [1] : vector<8x8xf32> to vector<8xf32>
    %127 = vector.shape_cast %126 : vector<8xf32> to vector<8x1xf32>
    %128 = vector.broadcast %127 : vector<8x1xf32> to vector<8x8xf32>
    %129 = arith.subf %125, %128 : vector<8x8xf32>
    %130 = math.exp %129 : vector<8x8xf32>
    %cst_36 = arith.constant dense<0.000000e+00> : vector<8xf32>
    %131 = vector.multi_reduction <add>, %130, %cst_36 [1] : vector<8x8xf32> to vector<8xf32>
    %132 = vector.shape_cast %131 : vector<8xf32> to vector<8x1xf32>
    %133 = tpu.reciprocal %132 {approx = true} : vector<8x1xf32> -> vector<8x1xf32>
    %134 = vector.broadcast %133 : vector<8x1xf32> to vector<8x8xf32>
    %135 = arith.mulf %130, %134 : vector<8x8xf32>
    %136 = arith.truncf %135 : vector<8x8xf32> to vector<8x8xbf16>
    %cst_37 = arith.constant -1.70141173E+38 : f32
    %137 = vector.broadcast %cst_37 : f32 to vector<8x8xf32>
    %138 = arith.select %31, %61, %137 : vector<8x8xi1>, vector<8x8xf32>
    %cst_38 = arith.constant dense<0xFF800000> : vector<8xf32>
    %139 = vector.multi_reduction <maximumf>, %138, %cst_38 [1] : vector<8x8xf32> to vector<8xf32>
    %140 = vector.shape_cast %139 : vector<8xf32> to vector<8x1xf32>
    %141 = vector.broadcast %140 : vector<8x1xf32> to vector<8x8xf32>
    %142 = arith.subf %138, %141 : vector<8x8xf32>
    %143 = math.exp %142 : vector<8x8xf32>
    %cst_39 = arith.constant dense<0.000000e+00> : vector<8xf32>
    %144 = vector.multi_reduction <add>, %143, %cst_39 [1] : vector<8x8xf32> to vector<8xf32>
    %145 = vector.shape_cast %144 : vector<8xf32> to vector<8x1xf32>
    %146 = tpu.reciprocal %145 {approx = true} : vector<8x1xf32> -> vector<8x1xf32>
    %147 = vector.broadcast %146 : vector<8x1xf32> to vector<8x8xf32>
    %148 = arith.mulf %143, %147 : vector<8x8xf32>
    %149 = arith.truncf %148 : vector<8x8xf32> to vector<8x8xbf16>
    %cst_40 = arith.constant -1.70141173E+38 : f32
    %150 = vector.broadcast %cst_40 : f32 to vector<8x8xf32>
    %151 = arith.select %31, %66, %150 : vector<8x8xi1>, vector<8x8xf32>
    %cst_41 = arith.constant dense<0xFF800000> : vector<8xf32>
    %152 = vector.multi_reduction <maximumf>, %151, %cst_41 [1] : vector<8x8xf32> to vector<8xf32>
    %153 = vector.shape_cast %152 : vector<8xf32> to vector<8x1xf32>
    %154 = vector.broadcast %153 : vector<8x1xf32> to vector<8x8xf32>
    %155 = arith.subf %151, %154 : vector<8x8xf32>
    %156 = math.exp %155 : vector<8x8xf32>
    %cst_42 = arith.constant dense<0.000000e+00> : vector<8xf32>
    %157 = vector.multi_reduction <add>, %156, %cst_42 [1] : vector<8x8xf32> to vector<8xf32>
    %158 = vector.shape_cast %157 : vector<8xf32> to vector<8x1xf32>
    %159 = tpu.reciprocal %158 {approx = true} : vector<8x1xf32> -> vector<8x1xf32>
    %160 = vector.broadcast %159 : vector<8x1xf32> to vector<8x8xf32>
    %161 = arith.mulf %156, %160 : vector<8x8xf32>
    %162 = arith.truncf %161 : vector<8x8xf32> to vector<8x8xbf16>
    %cst_43 = arith.constant -1.70141173E+38 : f32
    %163 = vector.broadcast %cst_43 : f32 to vector<8x8xf32>
    %164 = arith.select %31, %71, %163 : vector<8x8xi1>, vector<8x8xf32>
    %cst_44 = arith.constant dense<0xFF800000> : vector<8xf32>
    %165 = vector.multi_reduction <maximumf>, %164, %cst_44 [1] : vector<8x8xf32> to vector<8xf32>
    %166 = vector.shape_cast %165 : vector<8xf32> to vector<8x1xf32>
    %167 = vector.broadcast %166 : vector<8x1xf32> to vector<8x8xf32>
    %168 = arith.subf %164, %167 : vector<8x8xf32>
    %169 = math.exp %168 : vector<8x8xf32>
    %cst_45 = arith.constant dense<0.000000e+00> : vector<8xf32>
    %170 = vector.multi_reduction <add>, %169, %cst_45 [1] : vector<8x8xf32> to vector<8xf32>
    %171 = vector.shape_cast %170 : vector<8xf32> to vector<8x1xf32>
    %172 = tpu.reciprocal %171 {approx = true} : vector<8x1xf32> -> vector<8x1xf32>
    %173 = vector.broadcast %172 : vector<8x1xf32> to vector<8x8xf32>
    %174 = arith.mulf %169, %173 : vector<8x8xf32>
    %175 = arith.truncf %174 : vector<8x8xf32> to vector<8x8xbf16>
    %c0_46 = arith.constant 0 : index
    %c0_47 = arith.constant 0 : index
    %176 = vector.load %arg5[%c0_46, %c0_47] : memref<32x32xbf16, #tpu.memory_space<vmem>>, vector<32x32xbf16>
    %177 = vector.extract_strided_slice %28 {offsets = [0, 64], sizes = [8, 8], strides = [1, 1]} : vector<16x96xf32> to vector<8x8xf32>
    %178 = arith.truncf %177 : vector<8x8xf32> to vector<8x8xbf16>
    %cst_48 = arith.constant dense<0.000000e+00> : vector<8x8xf32>
    %179 = tpu.matmul %84, %178, %cst_48 {dimension_numbers = #tpu.dot_dimension_numbers<[1], [0], [0], [1], [0, 0, 1, 1], [], []>} : vector<8x8xbf16>, vector<8x8xbf16>, vector<8x8xf32> -> vector<8x8xf32>
    %180 = arith.truncf %179 : vector<8x8xf32> to vector<8x8xbf16>
    %181 = vector.extract_strided_slice %176 {offsets = [0, 0], sizes = [8, 32], strides = [1, 1]} : vector<32x32xbf16> to vector<8x32xbf16>
    %cst_49 = arith.constant dense<0.000000e+00> : vector<8x32xf32>
    %182 = tpu.matmul %180, %181, %cst_49 {dimension_numbers = #tpu.dot_dimension_numbers<[1], [0], [0], [1], [0, 0, 1, 1], [], []>} : vector<8x8xbf16>, vector<8x32xbf16>, vector<8x32xf32> -> vector<8x32xf32>
    %183 = vector.extract_strided_slice %28 {offsets = [0, 72], sizes = [8, 8], strides = [1, 1]} : vector<16x96xf32> to vector<8x8xf32>
    %184 = arith.truncf %183 : vector<8x8xf32> to vector<8x8xbf16>
    %cst_50 = arith.constant dense<0.000000e+00> : vector<8x8xf32>
    %185 = tpu.matmul %97, %184, %cst_50 {dimension_numbers = #tpu.dot_dimension_numbers<[1], [0], [0], [1], [0, 0, 1, 1], [], []>} : vector<8x8xbf16>, vector<8x8xbf16>, vector<8x8xf32> -> vector<8x8xf32>
    %186 = arith.truncf %185 : vector<8x8xf32> to vector<8x8xbf16>
    %187 = vector.extract_strided_slice %176 {offsets = [8, 0], sizes = [8, 32], strides = [1, 1]} : vector<32x32xbf16> to vector<8x32xbf16>
    %cst_51 = arith.constant dense<0.000000e+00> : vector<8x32xf32>
    %188 = tpu.matmul %186, %187, %cst_51 {dimension_numbers = #tpu.dot_dimension_numbers<[1], [0], [0], [1], [0, 0, 1, 1], [], []>} : vector<8x8xbf16>, vector<8x32xbf16>, vector<8x32xf32> -> vector<8x32xf32>
    %189 = arith.addf %182, %188 : vector<8x32xf32>
    %190 = vector.extract_strided_slice %28 {offsets = [0, 80], sizes = [8, 8], strides = [1, 1]} : vector<16x96xf32> to vector<8x8xf32>
    %191 = arith.truncf %190 : vector<8x8xf32> to vector<8x8xbf16>
    %cst_52 = arith.constant dense<0.000000e+00> : vector<8x8xf32>
    %192 = tpu.matmul %110, %191, %cst_52 {dimension_numbers = #tpu.dot_dimension_numbers<[1], [0], [0], [1], [0, 0, 1, 1], [], []>} : vector<8x8xbf16>, vector<8x8xbf16>, vector<8x8xf32> -> vector<8x8xf32>
    %193 = arith.truncf %192 : vector<8x8xf32> to vector<8x8xbf16>
    %194 = vector.extract_strided_slice %176 {offsets = [16, 0], sizes = [8, 32], strides = [1, 1]} : vector<32x32xbf16> to vector<8x32xbf16>
    %cst_53 = arith.constant dense<0.000000e+00> : vector<8x32xf32>
    %195 = tpu.matmul %193, %194, %cst_53 {dimension_numbers = #tpu.dot_dimension_numbers<[1], [0], [0], [1], [0, 0, 1, 1], [], []>} : vector<8x8xbf16>, vector<8x32xbf16>, vector<8x32xf32> -> vector<8x32xf32>
    %196 = arith.addf %189, %195 : vector<8x32xf32>
    %197 = vector.extract_strided_slice %28 {offsets = [0, 88], sizes = [8, 8], strides = [1, 1]} : vector<16x96xf32> to vector<8x8xf32>
    %198 = arith.truncf %197 : vector<8x8xf32> to vector<8x8xbf16>
    %cst_54 = arith.constant dense<0.000000e+00> : vector<8x8xf32>
    %199 = tpu.matmul %123, %198, %cst_54 {dimension_numbers = #tpu.dot_dimension_numbers<[1], [0], [0], [1], [0, 0, 1, 1], [], []>} : vector<8x8xbf16>, vector<8x8xbf16>, vector<8x8xf32> -> vector<8x8xf32>
    %200 = arith.truncf %199 : vector<8x8xf32> to vector<8x8xbf16>
    %201 = vector.extract_strided_slice %176 {offsets = [24, 0], sizes = [8, 32], strides = [1, 1]} : vector<32x32xbf16> to vector<8x32xbf16>
    %cst_55 = arith.constant dense<0.000000e+00> : vector<8x32xf32>
    %202 = tpu.matmul %200, %201, %cst_55 {dimension_numbers = #tpu.dot_dimension_numbers<[1], [0], [0], [1], [0, 0, 1, 1], [], []>} : vector<8x8xbf16>, vector<8x32xbf16>, vector<8x32xf32> -> vector<8x32xf32>
    %203 = arith.addf %196, %202 : vector<8x32xf32>
    %c0_56 = arith.constant 0 : index
    %c0_57 = arith.constant 0 : index
    %204 = vector.load %arg14[%c0_56, %c0_57] : memref<16x32xf32, #tpu.memory_space<vmem>>, vector<8x32xf32>
    tpu.vector_store %arg14[%c0_56, %c0_57], %203 {strides = array<i32>} : memref<16x32xf32, #tpu.memory_space<vmem>>, vector<8x32xf32>,
    %205 = vector.extract_strided_slice %28 {offsets = [8, 64], sizes = [8, 8], strides = [1, 1]} : vector<16x96xf32> to vector<8x8xf32>
    %206 = arith.truncf %205 : vector<8x8xf32> to vector<8x8xbf16>
    %cst_58 = arith.constant dense<0.000000e+00> : vector<8x8xf32>
    %207 = tpu.matmul %136, %206, %cst_58 {dimension_numbers = #tpu.dot_dimension_numbers<[1], [0], [0], [1], [0, 0, 1, 1], [], []>} : vector<8x8xbf16>, vector<8x8xbf16>, vector<8x8xf32> -> vector<8x8xf32>
    %208 = arith.truncf %207 : vector<8x8xf32> to vector<8x8xbf16>
    %209 = vector.extract_strided_slice %176 {offsets = [0, 0], sizes = [8, 32], strides = [1, 1]} : vector<32x32xbf16> to vector<8x32xbf16>
    %cst_59 = arith.constant dense<0.000000e+00> : vector<8x32xf32>
    %210 = tpu.matmul %208, %209, %cst_59 {dimension_numbers = #tpu.dot_dimension_numbers<[1], [0], [0], [1], [0, 0, 1, 1], [], []>} : vector<8x8xbf16>, vector<8x32xbf16>, vector<8x32xf32> -> vector<8x32xf32>
    %211 = vector.extract_strided_slice %28 {offsets = [8, 72], sizes = [8, 8], strides = [1, 1]} : vector<16x96xf32> to vector<8x8xf32>
    %212 = arith.truncf %211 : vector<8x8xf32> to vector<8x8xbf16>
    %cst_60 = arith.constant dense<0.000000e+00> : vector<8x8xf32>
    %213 = tpu.matmul %149, %212, %cst_60 {dimension_numbers = #tpu.dot_dimension_numbers<[1], [0], [0], [1], [0, 0, 1, 1], [], []>} : vector<8x8xbf16>, vector<8x8xbf16>, vector<8x8xf32> -> vector<8x8xf32>
    %214 = arith.truncf %213 : vector<8x8xf32> to vector<8x8xbf16>
    %215 = vector.extract_strided_slice %176 {offsets = [8, 0], sizes = [8, 32], strides = [1, 1]} : vector<32x32xbf16> to vector<8x32xbf16>
    %cst_61 = arith.constant dense<0.000000e+00> : vector<8x32xf32>
    %216 = tpu.matmul %214, %215, %cst_61 {dimension_numbers = #tpu.dot_dimension_numbers<[1], [0], [0], [1], [0, 0, 1, 1], [], []>} : vector<8x8xbf16>, vector<8x32xbf16>, vector<8x32xf32> -> vector<8x32xf32>
    %217 = arith.addf %210, %216 : vector<8x32xf32>
    %218 = vector.extract_strided_slice %28 {offsets = [8, 80], sizes = [8, 8], strides = [1, 1]} : vector<16x96xf32> to vector<8x8xf32>
    %219 = arith.truncf %218 : vector<8x8xf32> to vector<8x8xbf16>
    %cst_62 = arith.constant dense<0.000000e+00> : vector<8x8xf32>
    %220 = tpu.matmul %162, %219, %cst_62 {dimension_numbers = #tpu.dot_dimension_numbers<[1], [0], [0], [1], [0, 0, 1, 1], [], []>} : vector<8x8xbf16>, vector<8x8xbf16>, vector<8x8xf32> -> vector<8x8xf32>
    %221 = arith.truncf %220 : vector<8x8xf32> to vector<8x8xbf16>
    %222 = vector.extract_strided_slice %176 {offsets = [16, 0], sizes = [8, 32], strides = [1, 1]} : vector<32x32xbf16> to vector<8x32xbf16>
    %cst_63 = arith.constant dense<0.000000e+00> : vector<8x32xf32>
    %223 = tpu.matmul %221, %222, %cst_63 {dimension_numbers = #tpu.dot_dimension_numbers<[1], [0], [0], [1], [0, 0, 1, 1], [], []>} : vector<8x8xbf16>, vector<8x32xbf16>, vector<8x32xf32> -> vector<8x32xf32>
    %224 = arith.addf %217, %223 : vector<8x32xf32>
    %225 = vector.extract_strided_slice %28 {offsets = [8, 88], sizes = [8, 8], strides = [1, 1]} : vector<16x96xf32> to vector<8x8xf32>
    %226 = arith.truncf %225 : vector<8x8xf32> to vector<8x8xbf16>
    %cst_64 = arith.constant dense<0.000000e+00> : vector<8x8xf32>
    %227 = tpu.matmul %175, %226, %cst_64 {dimension_numbers = #tpu.dot_dimension_numbers<[1], [0], [0], [1], [0, 0, 1, 1], [], []>} : vector<8x8xbf16>, vector<8x8xbf16>, vector<8x8xf32> -> vector<8x8xf32>
    %228 = arith.truncf %227 : vector<8x8xf32> to vector<8x8xbf16>
    %229 = vector.extract_strided_slice %176 {offsets = [24, 0], sizes = [8, 32], strides = [1, 1]} : vector<32x32xbf16> to vector<8x32xbf16>
    %cst_65 = arith.constant dense<0.000000e+00> : vector<8x32xf32>
    %230 = tpu.matmul %228, %229, %cst_65 {dimension_numbers = #tpu.dot_dimension_numbers<[1], [0], [0], [1], [0, 0, 1, 1], [], []>} : vector<8x8xbf16>, vector<8x32xbf16>, vector<8x32xf32> -> vector<8x32xf32>
    %231 = arith.addf %224, %230 : vector<8x32xf32>
    %c8 = arith.constant 8 : index
    %c0_66 = arith.constant 0 : index
    %232 = vector.load %arg14[%c8, %c0_66] : memref<16x32xf32, #tpu.memory_space<vmem>>, vector<8x32xf32>
    tpu.vector_store %arg14[%c8, %c0_66], %231 {strides = array<i32>} : memref<16x32xf32, #tpu.memory_space<vmem>>, vector<8x32xf32>,
    %c0_67 = arith.constant 0 : index
    %c0_68 = arith.constant 0 : index
    %233 = vector.load %arg14[%c0_67, %c0_68] : memref<16x32xf32, #tpu.memory_space<vmem>>, vector<16x32xf32>
    %234 = arith.addf %0, %233 : vector<16x32xf32>
    %c0_69 = arith.constant 0 : index
    %c0_70 = arith.constant 0 : index
    %235 = vector.load %arg6[%c0_69, %c0_70] : memref<1x32xf32, #tpu.memory_space<vmem>>, vector<1x32xf32>
    %236 = vector.broadcast %235 : vector<1x32xf32> to vector<16x32xf32>
    %237 = arith.addf %234, %236 : vector<16x32xf32>
    %c0_71 = arith.constant 0 : index
    %c0_72 = arith.constant 0 : index
    %238 = vector.load %arg7[%c0_71, %c0_72] : memref<1x32xf32, #tpu.memory_space<vmem>>, vector<1x32xf32>
    %c0_73 = arith.constant 0 : index
    %c0_74 = arith.constant 0 : index
    %239 = vector.load %arg8[%c0_73, %c0_74] : memref<1x32xf32, #tpu.memory_space<vmem>>, vector<1x32xf32>
    %cst_75 = arith.constant dense<0.000000e+00> : vector<16xf32>
    %240 = vector.multi_reduction <add>, %237, %cst_75 [1] : vector<16x32xf32> to vector<16xf32>
    %241 = vector.shape_cast %240 : vector<16xf32> to vector<16x1xf32>
    %cst_76 = arith.constant 3.200000e+01 : f32
    %242 = vector.broadcast %cst_76 : f32 to vector<16x1xf32>
    %243 = arith.divf %241, %242 : vector<16x1xf32>
    %244 = vector.broadcast %243 : vector<16x1xf32> to vector<16x32xf32>
    %245 = arith.subf %237, %244 : vector<16x32xf32>
    %246 = arith.mulf %245, %245 : vector<16x32xf32>
    %cst_77 = arith.constant dense<0.000000e+00> : vector<16xf32>
    %247 = vector.multi_reduction <add>, %246, %cst_77 [1] : vector<16x32xf32> to vector<16xf32>
    %248 = vector.shape_cast %247 : vector<16xf32> to vector<16x1xf32>
    %cst_78 = arith.constant 3.200000e+01 : f32
    %249 = vector.broadcast %cst_78 : f32 to vector<16x1xf32>
    %250 = arith.divf %248, %249 : vector<16x1xf32>
    %cst_79 = arith.constant 9.99999974E-6 : f32
    %251 = vector.broadcast %cst_79 : f32 to vector<16x1xf32>
    %252 = arith.addf %250, %251 : vector<16x1xf32>
    %253 = math.rsqrt %252 : vector<16x1xf32>
    %254 = vector.broadcast %253 : vector<16x1xf32> to vector<16x32xf32>
    %255 = arith.mulf %245, %254 : vector<16x32xf32>
    %256 = vector.broadcast %238 : vector<1x32xf32> to vector<16x32xf32>
    %257 = arith.mulf %255, %256 : vector<16x32xf32>
    %258 = vector.broadcast %239 : vector<1x32xf32> to vector<16x32xf32>
    %259 = arith.addf %257, %258 : vector<16x32xf32>
    %260 = arith.truncf %259 : vector<16x32xf32> to vector<16x32xbf16>
    %c0_80 = arith.constant 0 : index
    %c0_81 = arith.constant 0 : index
    %261 = vector.load %arg9[%c0_80, %c0_81] : memref<32x128xbf16, #tpu.memory_space<vmem>>, vector<32x128xbf16>
    %cst_82 = arith.constant dense<0.000000e+00> : vector<16x128xf32>
    %262 = tpu.matmul %260, %261, %cst_82 {dimension_numbers = #tpu.dot_dimension_numbers<[1], [0], [0], [1], [0, 0, 1, 1], [], []>} : vector<16x32xbf16>, vector<32x128xbf16>, vector<16x128xf32> -> vector<16x128xf32>
    %c0_83 = arith.constant 0 : index
    %c0_84 = arith.constant 0 : index
    %263 = vector.load %arg10[%c0_83, %c0_84] : memref<1x128xf32, #tpu.memory_space<vmem>>, vector<1x128xf32>
    %264 = vector.broadcast %263 : vector<1x128xf32> to vector<16x128xf32>
    %265 = arith.addf %262, %264 : vector<16x128xf32>
    %cst_85 = arith.constant 5.000000e-01 : f32
    %266 = vector.broadcast %cst_85 : f32 to vector<16x128xf32>
    %267 = arith.mulf %266, %265 : vector<16x128xf32>
    %cst_86 = arith.constant 4.471500e-02 : f32
    %268 = vector.broadcast %cst_86 : f32 to vector<16x128xf32>
    %269 = arith.mulf %268, %265 : vector<16x128xf32>
    %270 = arith.mulf %269, %265 : vector<16x128xf32>
    %271 = arith.mulf %270, %265 : vector<16x128xf32>
    %272 = arith.addf %265, %271 : vector<16x128xf32>
    %cst_87 = arith.constant 0.797884583 : f32
    %273 = vector.broadcast %cst_87 : f32 to vector<16x128xf32>
    %274 = arith.mulf %273, %272 : vector<16x128xf32>
    %275 = math.tanh %274 : vector<16x128xf32>
    %cst_88 = arith.constant 1.000000e+00 : f32
    %276 = vector.broadcast %cst_88 : f32 to vector<16x128xf32>
    %277 = arith.addf %276, %275 : vector<16x128xf32>
    %278 = arith.mulf %267, %277 : vector<16x128xf32>
    %279 = arith.truncf %278 : vector<16x128xf32> to vector<16x128xbf16>
    %c0_89 = arith.constant 0 : index
    %c0_90 = arith.constant 0 : index
    %280 = vector.load %arg11[%c0_89, %c0_90] : memref<128x32xbf16, #tpu.memory_space<vmem>>, vector<128x32xbf16>
    %cst_91 = arith.constant dense<0.000000e+00> : vector<16x32xf32>
    %281 = tpu.matmul %279, %280, %cst_91 {dimension_numbers = #tpu.dot_dimension_numbers<[1], [0], [0], [1], [0, 0, 1, 1], [], []>} : vector<16x128xbf16>, vector<128x32xbf16>, vector<16x32xf32> -> vector<16x32xf32>
    %c0_92 = arith.constant 0 : index
    %c0_93 = arith.constant 0 : index
    %282 = vector.load %arg12[%c0_92, %c0_93] : memref<1x32xf32, #tpu.memory_space<vmem>>, vector<1x32xf32>
    %283 = vector.broadcast %282 : vector<1x32xf32> to vector<16x32xf32>
    %284 = arith.addf %281, %283 : vector<16x32xf32>
    %285 = arith.addf %237, %284 : vector<16x32xf32>
    %c0_94 = arith.constant 0 : index
    %c0_95 = arith.constant 0 : index
    %286 = vector.load %arg13[%c0_94, %c0_95] : memref<16x32xf32, #tpu.memory_space<vmem>>, vector<16x32xf32>
    tpu.vector_store %arg13[%c0_94, %c0_95], %285 {strides = array<i32>} : memref<16x32xf32, #tpu.memory_space<vmem>>, vector<16x32xf32>,
    return
  }
}

</mosaic_0001>

<llo_original>
// kernel: gpt2_block.1
$region0: #{gpt2_block.1}
  #allocation0 [shape = 'u32[]', space=smem, size = 0x4, offset = 0x4, fixed_abs, tag = 'smem constant byte address 0x4 - core index']
  #allocation1 [shape = 'u32[144,128]{1,0:T(1,128)}', space=vmem, size = 0x12000, scoped, tag = 'internal scratch']
  #allocation2 [shape = 'f32[16,32]{1,0:T(8,128)}', space=vmem, size = 0x2000, scoped, tag = 'scratch operand']
  %s0 = inlined_call_operand.vmem [shape: f32[16,32], index: 0, kind: input, shape index: {}]
  %s1 = inlined_call_operand.vmem [shape: f32[1,32], index: 1, kind: input, shape index: {}]
  %s2 = inlined_call_operand.vmem [shape: f32[1,32], index: 2, kind: input, shape index: {}]
  %s3 = inlined_call_operand.vmem [shape: bf16[32,96], index: 3, kind: input, shape index: {}]
  %s4 = inlined_call_operand.vmem [shape: f32[1,96], index: 4, kind: input, shape index: {}]
  %s5 = inlined_call_operand.vmem [shape: bf16[32,32], index: 5, kind: input, shape index: {}]
  %s6 = inlined_call_operand.vmem [shape: f32[1,32], index: 6, kind: input, shape index: {}]
  %s7 = inlined_call_operand.vmem [shape: f32[1,32], index: 7, kind: input, shape index: {}]
  %s8 = inlined_call_operand.vmem [shape: f32[1,32], index: 8, kind: input, shape index: {}]
  %s9 = inlined_call_operand.vmem [shape: bf16[32,128], index: 9, kind: input, shape index: {}]
  %s10 = inlined_call_operand.vmem [shape: f32[1,128], index: 10, kind: input, shape index: {}]
  %s11 = inlined_call_operand.vmem [shape: bf16[128,32], index: 11, kind: input, shape index: {}]
  %s12 = inlined_call_operand.vmem [shape: f32[1,32], index: 12, kind: input, shape index: {}]
  %s13 = inlined_call_operand.hbm [shape: f32[16,32], index: 13, kind: output, shape index: {}]
  %s14 = sld [smem:[#allocation0]]
  $region62: #{gpt2_block.1} parent=0
    _
  %s16 = ssub.s32 1, %s14
  %s17 = scalar_select 0, %s16, %s14
  $region1: #{gpt2_block.1} parent=0
    #allocation3 [shape = 'u8[8192]{0}', space=vmem, size = 0x2000, scoped, tag = 'output window, operand 0, single buffered']
    #allocation4 [shape = 's32[1]{0}', space=sflag, size = 0x4, scoped, tag = 'scoped memory for gpt2_block.1']
    %18 = vsyncpa [#allocation4], 0
    // Predicated region
    $region2: #{gpt2_block.1} parent=1 // pred_check
      _
    $region3: #{gpt2_block.1} parent=1 // pred_check_branch
      %20 = sbr.rel (0) target = $region5
    $region4: #{gpt2_block.1} parent=1 // pred_region
      _
    $region5: #{gpt2_block.1} parent=1 // pred_fallthru
      _
    // Predicated region
    $region6: #{gpt2_block.1} parent=1 // pred_check
      _
    $region7: #{gpt2_block.1} parent=1 // pred_check_branch
      %22 = sbr.rel (0) target = $region9
    $region8: #{gpt2_block.1} parent=1 // pred_region
      _
    $region9: #{gpt2_block.1} parent=1 // pred_fallthru
      _
    // Predicated region
    $region10: #{gpt2_block.1} parent=1 // pred_check
      _
    $region11: #{gpt2_block.1} parent=1 // pred_check_branch
      %24 = sbr.rel (0) target = $region13
    $region12: #{gpt2_block.1} parent=1 // pred_region
      _
    $region13: #{gpt2_block.1} parent=1 // pred_fallthru
      _
    // Predicated region
    $region14: #{gpt2_block.1} parent=1 // pred_check
      _
    $region15: #{gpt2_block.1} parent=1 // pred_check_branch
      %26 = sbr.rel (0) target = $region17
    $region16: #{gpt2_block.1} parent=1 // pred_region
      _
    $region17: #{gpt2_block.1} parent=1 // pred_fallthru
      _
    // Predicated region
    $region18: #{gpt2_block.1} parent=1 // pred_check
      _
    $region19: #{gpt2_block.1} parent=1 // pred_check_branch
      %28 = sbr.rel (0) target = $region21
    $region20: #{gpt2_block.1} parent=1 // pred_region
      _
    $region21: #{gpt2_block.1} parent=1 // pred_fallthru
      _
    // Predicated region
    $region22: #{gpt2_block.1} parent=1 // pred_check
      _
    $region23: #{gpt2_block.1} parent=1 // pred_check_branch
      %30 = sbr.rel (0) target = $region25
    $region24: #{gpt2_block.1} parent=1 // pred_region
      _
    $region25: #{gpt2_block.1} parent=1 // pred_fallthru
      _
    // Predicated region
    $region26: #{gpt2_block.1} parent=1 // pred_check
      _
    $region27: #{gpt2_block.1} parent=1 // pred_check_branch
      %32 = sbr.rel (0) target = $region29
    $region28: #{gpt2_block.1} parent=1 // pred_region
      _
    $region29: #{gpt2_block.1} parent=1 // pred_fallthru
      _
    // Predicated region
    $region30: #{gpt2_block.1} parent=1 // pred_check
      _
    $region31: #{gpt2_block.1} parent=1 // pred_check_branch
      %34 = sbr.rel (0) target = $region33
    $region32: #{gpt2_block.1} parent=1 // pred_region
      _
    $region33: #{gpt2_block.1} parent=1 // pred_fallthru
      _
    // Predicated region
    $region34: #{gpt2_block.1} parent=1 // pred_check
      _
    $region35: #{gpt2_block.1} parent=1 // pred_check_branch
      %36 = sbr.rel (0) target = $region37
    $region36: #{gpt2_block.1} parent=1 // pred_region
      _
    $region37: #{gpt2_block.1} parent=1 // pred_fallthru
      _
    // Predicated region
    $region38: #{gpt2_block.1} parent=1 // pred_check
      _
    $region39: #{gpt2_block.1} parent=1 // pred_check_branch
      %38 = sbr.rel (0) target = $region41
    $region40: #{gpt2_block.1} parent=1 // pred_region
      _
    $region41: #{gpt2_block.1} parent=1 // pred_fallthru
      _
    // Predicated region
    $region42: #{gpt2_block.1} parent=1 // pred_check
      _
    $region43: #{gpt2_block.1} parent=1 // pred_check_branch
      %40 = sbr.rel (0) target = $region45
    $region44: #{gpt2_block.1} parent=1 // pred_region
      _
    $region45: #{gpt2_block.1} parent=1 // pred_fallthru
      _
    // Predicated region
    $region46: #{gpt2_block.1} parent=1 // pred_check
      _
    $region47: #{gpt2_block.1} parent=1 // pred_check_branch
      %42 = sbr.rel (0) target = $region49
    $region48: #{gpt2_block.1} parent=1 // pred_region
      _
    $region49: #{gpt2_block.1} parent=1 // pred_fallthru
      _
    // Predicated region
    $region50: #{gpt2_block.1} parent=1 // pred_check
      _
    $region51: #{gpt2_block.1} parent=1 // pred_check_branch
      %44 = sbr.rel (0) target = $region53
    $region52: #{gpt2_block.1} parent=1 // pred_region
      _
    $region53: #{gpt2_block.1} parent=1 // pred_fallthru
      _
    %v46 = vld [vmem:[%s0] sm:$0xff]
    %v47 = vld [vmem:[%s0 + $0x8] sm:$0xff]
    %v48 = vld [vmem:[%s1] sm:$0x1]
    %v49 = vld [vmem:[%s2] sm:$0x1]
    %vm50 = vcmask 261120
    %v51 = vsel %vm50, %v46, 0.0
    %52 = vadd.xlane.f32.xlu0 %v51
    %v53 = vpop.xlane.xlu0 %52
    %v54 = vsel %vm50, %v47, 0.0
    %55 = vadd.xlane.f32.xlu0 %v54
    %v56 = vpop.xlane.xlu0 %55
    %v57 = vrcp.pop 32.0
    %v58 = vmul.f32 %v53, %v57
    %v59 = vmul.f32 %v56, %v57
    %v60 = vsub.f32 %v46, %v58
    %v61 = vsub.f32 %v47, %v59
    %v62 = vmul.f32 %v60, %v60
    %v63 = vmul.f32 %v61, %v61
    %v64 = vsel %vm50, %v62, 0.0
    %65 = vadd.xlane.f32.xlu0 %v64
    %v66 = vpop.xlane.xlu0 %65
    %v67 = vsel %vm50, %v63, 0.0
    %68 = vadd.xlane.f32.xlu0 %v67
    %v69 = vpop.xlane.xlu0 %68
    %v70 = vmul.f32 %v66, %v57
    %v71 = vmul.f32 %v69, %v57
    %v72 = vadd.f32 %v70, 1e-05
    %v73 = vadd.f32 %v71, 1e-05
    %v74 = vrsqrt.pop %v72
    %v75 = vrsqrt.pop %v73
    %v76 = vmul.f32 %v60, %v74
    %v77 = vmul.f32 %v61, %v75
    %v79 = vlaneseq
    %v80 = vshrl.u32 %v79, 7
    %v81 = vsub.s32 0, %v80
    %v82 = vrot.slane %v48, %v81
    %v84 = vmul.f32 %v76, %v82
    %v85 = vmul.f32 %v77, %v82
    %v87 = vlaneseq
    %v88 = vshrl.u32 %v87, 7
    %v89 = vsub.s32 0, %v88
    %v90 = vrot.slane %v49, %v89
    %v92 = vadd.f32 %v84, %v90
    %v93 = vadd.f32 %v85, %v90
    %v94 = vpack.c.bf16 %v93, %v92
    %v95 = vld [vmem:[%s3] sm:$0xf]
    %v96 = vld [vmem:[%s3 + $0x4] sm:$0xf]
    %v97 = vld [vmem:[%s3 + $0x8] sm:$0xf]
    %v98 = vld [vmem:[%s3 + $0xc] sm:$0xf]
    %v99 = vld [vmem:[%s4] sm:$0x1]
    %v101 = vlaneseq
    %v102 = vshrl.u32 %v101, 7
    %v103 = vsub.s32 0, %v102
    %v104 = vrot.slane %v99, %v103
    %v110 = vunpack.c.l.b16 %v95
    %v111 = vunpack.c.l.b16 %v96
    %v112 = vunpack.c.l.b16 %v97
    %v113 = vunpack.c.l.b16 %v98
    %v114 = vpack.c.b16 %v111, %v110
    %v115 = vpack.c.b16 %v113, %v112
    %v119 = vsel %vm50, %v94, 0
    %121 = vmatprep.subr.bf16.mxu0 0
    %122 = vmatpush1.bf16.msra.mxu0 0
    %123 = vmatprep.subr.bf16.mxu0 0
    %124 = vmatpush1.bf16.msra.mxu0 0
    %125 = vmatprep.subr.bf16.mxu0 0
    %126 = vmatpush1.bf16.msra.mxu0 0
    %127 = vmatprep.subr.bf16.mxu0 0
    %128 = vmatpush1.bf16.msra.mxu0 0
    %129 = vmatprep.subr.bf16.mxu0 0
    %130 = vmatpush1.bf16.msra.mxu0 0
    %131 = vmatprep.subr.bf16.mxu0 0
    %132 = vmatpush1.bf16.msra.mxu0 0
    %133 = vmatprep.subr.bf16.mxu0 0
    %134 = vmatpush1.bf16.msra.mxu0 %v115
    %135 = vmatprep.subr.bf16.mxu0 0
    %136 = vmatpush1.bf16.msra.mxu0 %v114
    %137 = vmatprep.subr.bf16.mxu0 0
    %138 = vmatpush2.bf16.msra.mxu0 0
    %139 = vmatprep.subr.bf16.mxu0 0
    %140 = vmatpush2.bf16.msra.mxu0 0
    %141 = vmatprep.subr.bf16.mxu0 0
    %142 = vmatpush2.bf16.msra.mxu0 0
    %143 = vmatprep.subr.bf16.mxu0 0
    %144 = vmatpush2.bf16.msra.mxu0 0
    %145 = vmatprep.subr.bf16.mxu0 0
    %146 = vmatpush2.bf16.msra.mxu0 0
    %147 = vmatprep.subr.bf16.mxu0 0
    %148 = vmatpush2.bf16.msra.mxu0 0
    %149 = vmatprep.subr.bf16.mxu0 0
    %150 = vmatpush2.bf16.msra.mxu0 0
    %151 = vmatprep.subr.bf16.mxu0 0
    %152 = vmatpush2.bf16.msra.mxu0 0
    %153 = vmatprep.mubr.bf16.mxu0 0
    %154 = vmatmul.mubr.bf16.gmra.mxu0 %v119
    %v155 = vpop.f32.mrf.mxu0
    %v156 = vadd.f32 %v104, %v155
    %v157 = vpop.f32.mrf.mxu0
    %v158 = vpop.f32.mrf.mxu0
    %v159 = vadd.f32 %v104, %v158
    %v160 = vpop.f32.mrf.mxu0
    %161 = vdwg.mxu0
    %v162 = vlaneseq
    %v163 = vshrl.u32 %v162, 7
    %v164 = vlaneseq
    %v165 = vand.u32 %v164, 127
    %vm166 = vcmp.le.s32.totalorder %v165, %v163
    %v167 = vpack.c.bf16 %v156, %v156
    %169 = vrot.lane.b32.xlu0 %v167, 96
    %v170 = vpop.permute.xlu0 %169
    %vm171 = vcmask 64512
    %v173 = vsel %vm171, %v167, 0
    %v176 = vsel %vm171, %v170, 0
    %178 = vmatprep.subr.bf16.mxu0 0
    %179 = vmatpush1.bf16.xpose.msra.mxu0 0
    %180 = vmatprep.subr.bf16.mxu0 0
    %181 = vmatpush1.bf16.xpose.msra.mxu0 0
    %182 = vmatprep.subr.bf16.mxu0 0
    %183 = vmatpush1.bf16.xpose.msra.mxu0 0
    %184 = vmatprep.subr.bf16.mxu0 0
    %185 = vmatpush1.bf16.xpose.msra.mxu0 0
    %186 = vmatprep.subr.bf16.mxu0 0
    %187 = vmatpush1.bf16.xpose.msra.mxu0 0
    %188 = vmatprep.subr.bf16.mxu0 0
    %189 = vmatpush1.bf16.xpose.msra.mxu0 0
    %190 = vmatprep.subr.bf16.mxu0 0
    %191 = vmatpush1.bf16.xpose.msra.mxu0 0
    %192 = vmatprep.subr.bf16.mxu0 0
    %193 = vmatpush1.bf16.xpose.msra.mxu0 %v176
    %194 = vmatprep.subr.bf16.mxu0 0
    %195 = vmatpush2.bf16.xpose.msra.mxu0 0
    %196 = vmatprep.subr.bf16.mxu0 0
    %197 = vmatpush2.bf16.xpose.msra.mxu0 0
    %198 = vmatprep.subr.bf16.mxu0 0
    %199 = vmatpush2.bf16.xpose.msra.mxu0 0
    %200 = vmatprep.subr.bf16.mxu0 0
    %201 = vmatpush2.bf16.xpose.msra.mxu0 0
    %202 = vmatprep.subr.bf16.mxu0 0
    %203 = vmatpush2.bf16.xpose.msra.mxu0 0
    %204 = vmatprep.subr.bf16.mxu0 0
    %205 = vmatpush2.bf16.xpose.msra.mxu0 0
    %206 = vmatprep.subr.bf16.mxu0 0
    %207 = vmatpush2.bf16.xpose.msra.mxu0 0
    %208 = vmatprep.subr.bf16.mxu0 0
    %209 = vmatpush2.bf16.xpose.msra.mxu0 0
    %210 = vmatprep.mubr.bf16.mxu0 0
    %211 = vmatmul.mubr.bf16.gmra.mxu0 %v173
    %v212 = vpop.f32.mrf.mxu0
    %v213 = vadd.f32 0.0, %v212
    %v214 = vpop.f32.mrf.mxu0
    %v215 = vpop.f32.mrf.mxu0
    %v216 = vpop.f32.mrf.mxu0
    %217 = vdwg.mxu0
    %218 = vrot.lane.b32.xlu0 %v167, 120
    %v219 = vpop.permute.xlu0 %218
    %220 = vrot.lane.b32.xlu0 %v167, 88
    %v221 = vpop.permute.xlu0 %220
    %v223 = vsel %vm171, %v219, 0
    %v226 = vsel %vm171, %v221, 0
    %228 = vmatprep.subr.bf16.mxu0 0
    %229 = vmatpush1.bf16.xpose.msra.mxu0 0
    %230 = vmatprep.subr.bf16.mxu0 0
    %231 = vmatpush1.bf16.xpose.msra.mxu0 0
    %232 = vmatprep.subr.bf16.mxu0 0
    %233 = vmatpush1.bf16.xpose.msra.mxu0 0
    %234 = vmatprep.subr.bf16.mxu0 0
    %235 = vmatpush1.bf16.xpose.msra.mxu0 0
    %236 = vmatprep.subr.bf16.mxu0 0
    %237 = vmatpush1.bf16.xpose.msra.mxu0 0
    %238 = vmatprep.subr.bf16.mxu0 0
    %239 = vmatpush1.bf16.xpose.msra.mxu0 0
    %240 = vmatprep.subr.bf16.mxu0 0
    %241 = vmatpush1.bf16.xpose.msra.mxu0 0
    %242 = vmatprep.subr.bf16.mxu0 0
    %243 = vmatpush1.bf16.xpose.msra.mxu0 %v226
    %244 = vmatprep.subr.bf16.mxu0 0
    %245 = vmatpush2.bf16.xpose.msra.mxu0 0
    %246 = vmatprep.subr.bf16.mxu0 0
    %247 = vmatpush2.bf16.xpose.msra.mxu0 0
    %248 = vmatprep.subr.bf16.mxu0 0
    %249 = vmatpush2.bf16.xpose.msra.mxu0 0
    %250 = vmatprep.subr.bf16.mxu0 0
    %251 = vmatpush2.bf16.xpose.msra.mxu0 0
    %252 = vmatprep.subr.bf16.mxu0 0
    %253 = vmatpush2.bf16.xpose.msra.mxu0 0
    %254 = vmatprep.subr.bf16.mxu0 0
    %255 = vmatpush2.bf16.xpose.msra.mxu0 0
    %256 = vmatprep.subr.bf16.mxu0 0
    %257 = vmatpush2.bf16.xpose.msra.mxu0 0
    %258 = vmatprep.subr.bf16.mxu0 0
    %259 = vmatpush2.bf16.xpose.msra.mxu0 0
    %260 = vmatprep.mubr.bf16.mxu0 0
    %261 = vmatmul.mubr.bf16.gmra.mxu0 %v223
    %v262 = vpop.f32.mrf.mxu0
    %v263 = vadd.f32 0.0, %v262
    %v264 = vpop.f32.mrf.mxu0
    %v265 = vpop.f32.mrf.mxu0
    %v266 = vpop.f32.mrf.mxu0
    %267 = vdwg.mxu0
    %268 = vrot.lane.b32.xlu0 %v167, 112
    %v269 = vpop.permute.xlu0 %268
    %270 = vrot.lane.b32.xlu0 %v167, 80
    %v271 = vpop.permute.xlu0 %270
    %v273 = vsel %vm171, %v269, 0
    %v276 = vsel %vm171, %v271, 0
    %278 = vmatprep.subr.bf16.mxu0 0
    %279 = vmatpush1.bf16.xpose.msra.mxu0 0
    %280 = vmatprep.subr.bf16.mxu0 0
    %281 = vmatpush1.bf16.xpose.msra.mxu0 0
    %282 = vmatprep.subr.bf16.mxu0 0
    %283 = vmatpush1.bf16.xpose.msra.mxu0 0
    %284 = vmatprep.subr.bf16.mxu0 0
    %285 = vmatpush1.bf16.xpose.msra.mxu0 0
    %286 = vmatprep.subr.bf16.mxu0 0
    %287 = vmatpush1.bf16.xpose.msra.mxu0 0
    %288 = vmatprep.subr.bf16.mxu0 0
    %289 = vmatpush1.bf16.xpose.msra.mxu0 0
    %290 = vmatprep.subr.bf16.mxu0 0
    %291 = vmatpush1.bf16.xpose.msra.mxu0 0
    %292 = vmatprep.subr.bf16.mxu0 0
    %293 = vmatpush1.bf16.xpose.msra.mxu0 %v276
    %294 = vmatprep.subr.bf16.mxu0 0
    %295 = vmatpush2.bf16.xpose.msra.mxu0 0
    %296 = vmatprep.subr.bf16.mxu0 0
    %297 = vmatpush2.bf16.xpose.msra.mxu0 0
    %298 = vmatprep.subr.bf16.mxu0 0
    %299 = vmatpush2.bf16.xpose.msra.mxu0 0
    %300 = vmatprep.subr.bf16.mxu0 0
    %301 = vmatpush2.bf16.xpose.msra.mxu0 0
    %302 = vmatprep.subr.bf16.mxu0 0
    %303 = vmatpush2.bf16.xpose.msra.mxu0 0
    %304 = vmatprep.subr.bf16.mxu0 0
    %305 = vmatpush2.bf16.xpose.msra.mxu0 0
    %306 = vmatprep.subr.bf16.mxu0 0
    %307 = vmatpush2.bf16.xpose.msra.mxu0 0
    %308 = vmatprep.subr.bf16.mxu0 0
    %309 = vmatpush2.bf16.xpose.msra.mxu0 0
    %310 = vmatprep.mubr.bf16.mxu0 0
    %311 = vmatmul.mubr.bf16.gmra.mxu0 %v273
    %v312 = vpop.f32.mrf.mxu0
    %v313 = vadd.f32 0.0, %v312
    %v314 = vpop.f32.mrf.mxu0
    %v315 = vpop.f32.mrf.mxu0
    %v316 = vpop.f32.mrf.mxu0
    %317 = vdwg.mxu0
    %318 = vrot.lane.b32.xlu0 %v167, 104
    %v319 = vpop.permute.xlu0 %318
    %320 = vrot.lane.b32.xlu0 %v167, 72
    %v321 = vpop.permute.xlu0 %320
    %v323 = vsel %vm171, %v319, 0
    %v326 = vsel %vm171, %v321, 0
    %328 = vmatprep.subr.bf16.mxu0 0
    %329 = vmatpush1.bf16.xpose.msra.mxu0 0
    %330 = vmatprep.subr.bf16.mxu0 0
    %331 = vmatpush1.bf16.xpose.msra.mxu0 0
    %332 = vmatprep.subr.bf16.mxu0 0
    %333 = vmatpush1.bf16.xpose.msra.mxu0 0
    %334 = vmatprep.subr.bf16.mxu0 0
    %335 = vmatpush1.bf16.xpose.msra.mxu0 0
    %336 = vmatprep.subr.bf16.mxu0 0
    %337 = vmatpush1.bf16.xpose.msra.mxu0 0
    %338 = vmatprep.subr.bf16.mxu0 0
    %339 = vmatpush1.bf16.xpose.msra.mxu0 0
    %340 = vmatprep.subr.bf16.mxu0 0
    %341 = vmatpush1.bf16.xpose.msra.mxu0 0
    %342 = vmatprep.subr.bf16.mxu0 0
    %343 = vmatpush1.bf16.xpose.msra.mxu0 %v326
    %344 = vmatprep.subr.bf16.mxu0 0
    %345 = vmatpush2.bf16.xpose.msra.mxu0 0
    %346 = vmatprep.subr.bf16.mxu0 0
    %347 = vmatpush2.bf16.xpose.msra.mxu0 0
    %348 = vmatprep.subr.bf16.mxu0 0
    %349 = vmatpush2.bf16.xpose.msra.mxu0 0
    %350 = vmatprep.subr.bf16.mxu0 0
    %351 = vmatpush2.bf16.xpose.msra.mxu0 0
    %352 = vmatprep.subr.bf16.mxu0 0
    %353 = vmatpush2.bf16.xpose.msra.mxu0 0
    %354 = vmatprep.subr.bf16.mxu0 0
    %355 = vmatpush2.bf16.xpose.msra.mxu0 0
    %356 = vmatprep.subr.bf16.mxu0 0
    %357 = vmatpush2.bf16.xpose.msra.mxu0 0
    %358 = vmatprep.subr.bf16.mxu0 0
    %359 = vmatpush2.bf16.xpose.msra.mxu0 0
    %360 = vmatprep.mubr.bf16.mxu0 0
    %361 = vmatmul.mubr.bf16.gmra.mxu0 %v323
    %v362 = vpop.f32.mrf.mxu0
    %v363 = vadd.f32 0.0, %v362
    %v364 = vpop.f32.mrf.mxu0
    %v365 = vpop.f32.mrf.mxu0
    %v366 = vpop.f32.mrf.mxu0
    %367 = vdwg.mxu0
    %v368 = vpack.c.bf16 %v159, %v159
    %370 = vrot.lane.b32.xlu0 %v368, 96
    %v371 = vpop.permute.xlu0 %370
    %v373 = vsel %vm171, %v368, 0
    %v376 = vsel %vm171, %v371, 0
    %378 = vmatprep.subr.bf16.mxu0 0
    %379 = vmatpush1.bf16.xpose.msra.mxu0 0
    %380 = vmatprep.subr.bf16.mxu0 0
    %381 = vmatpush1.bf16.xpose.msra.mxu0 0
    %382 = vmatprep.subr.bf16.mxu0 0
    %383 = vmatpush1.bf16.xpose.msra.mxu0 0
    %384 = vmatprep.subr.bf16.mxu0 0
    %385 = vmatpush1.bf16.xpose.msra.mxu0 0
    %386 = vmatprep.subr.bf16.mxu0 0
    %387 = vmatpush1.bf16.xpose.msra.mxu0 0
    %388 = vmatprep.subr.bf16.mxu0 0
    %389 = vmatpush1.bf16.xpose.msra.mxu0 0
    %390 = vmatprep.subr.bf16.mxu0 0
    %391 = vmatpush1.bf16.xpose.msra.mxu0 0
    %392 = vmatprep.subr.bf16.mxu0 0
    %393 = vmatpush1.bf16.xpose.msra.mxu0 %v376
    %394 = vmatprep.subr.bf16.mxu0 0
    %395 = vmatpush2.bf16.xpose.msra.mxu0 0
    %396 = vmatprep.subr.bf16.mxu0 0
    %397 = vmatpush2.bf16.xpose.msra.mxu0 0
    %398 = vmatprep.subr.bf16.mxu0 0
    %399 = vmatpush2.bf16.xpose.msra.mxu0 0
    %400 = vmatprep.subr.bf16.mxu0 0
    %401 = vmatpush2.bf16.xpose.msra.mxu0 0
    %402 = vmatprep.subr.bf16.mxu0 0
    %403 = vmatpush2.bf16.xpose.msra.mxu0 0
    %404 = vmatprep.subr.bf16.mxu0 0
    %405 = vmatpush2.bf16.xpose.msra.mxu0 0
    %406 = vmatprep.subr.bf16.mxu0 0
    %407 = vmatpush2.bf16.xpose.msra.mxu0 0
    %408 = vmatprep.subr.bf16.mxu0 0
    %409 = vmatpush2.bf16.xpose.msra.mxu0 0
    %410 = vmatprep.mubr.bf16.mxu0 0
    %411 = vmatmul.mubr.bf16.gmra.mxu0 %v373
    %v412 = vpop.f32.mrf.mxu0
    %v413 = vadd.f32 0.0, %v412
    %v414 = vpop.f32.mrf.mxu0
    %v415 = vpop.f32.mrf.mxu0
    %v416 = vpop.f32.mrf.mxu0
    %417 = vdwg.mxu0
    %418 = vrot.lane.b32.xlu0 %v368, 120
    %v419 = vpop.permute.xlu0 %418
    %420 = vrot.lane.b32.xlu0 %v368, 88
    %v421 = vpop.permute.xlu0 %420
    %v423 = vsel %vm171, %v419, 0
    %v426 = vsel %vm171, %v421, 0
    %428 = vmatprep.subr.bf16.mxu0 0
    %429 = vmatpush1.bf16.xpose.msra.mxu0 0
    %430 = vmatprep.subr.bf16.mxu0 0
    %431 = vmatpush1.bf16.xpose.msra.mxu0 0
    %432 = vmatprep.subr.bf16.mxu0 0
    %433 = vmatpush1.bf16.xpose.msra.mxu0 0
    %434 = vmatprep.subr.bf16.mxu0 0
    %435 = vmatpush1.bf16.xpose.msra.mxu0 0
    %436 = vmatprep.subr.bf16.mxu0 0
    %437 = vmatpush1.bf16.xpose.msra.mxu0 0
    %438 = vmatprep.subr.bf16.mxu0 0
    %439 = vmatpush1.bf16.xpose.msra.mxu0 0
    %440 = vmatprep.subr.bf16.mxu0 0
    %441 = vmatpush1.bf16.xpose.msra.mxu0 0
    %442 = vmatprep.subr.bf16.mxu0 0
    %443 = vmatpush1.bf16.xpose.msra.mxu0 %v426
    %444 = vmatprep.subr.bf16.mxu0 0
    %445 = vmatpush2.bf16.xpose.msra.mxu0 0
    %446 = vmatprep.subr.bf16.mxu0 0
    %447 = vmatpush2.bf16.xpose.msra.mxu0 0
    %448 = vmatprep.subr.bf16.mxu0 0
    %449 = vmatpush2.bf16.xpose.msra.mxu0 0
    %450 = vmatprep.subr.bf16.mxu0 0
    %451 = vmatpush2.bf16.xpose.msra.mxu0 0
    %452 = vmatprep.subr.bf16.mxu0 0
    %453 = vmatpush2.bf16.xpose.msra.mxu0 0
    %454 = vmatprep.subr.bf16.mxu0 0
    %455 = vmatpush2.bf16.xpose.msra.mxu0 0
    %456 = vmatprep.subr.bf16.mxu0 0
    %457 = vmatpush2.bf16.xpose.msra.mxu0 0
    %458 = vmatprep.subr.bf16.mxu0 0
    %459 = vmatpush2.bf16.xpose.msra.mxu0 0
    %460 = vmatprep.mubr.bf16.mxu0 0
    %461 = vmatmul.mubr.bf16.gmra.mxu0 %v423
    %v462 = vpop.f32.mrf.mxu0
    %v463 = vadd.f32 0.0, %v462
    %v464 = vpop.f32.mrf.mxu0
    %v465 = vpop.f32.mrf.mxu0
    %v466 = vpop.f32.mrf.mxu0
    %467 = vdwg.mxu0
    %468 = vrot.lane.b32.xlu0 %v368, 112
    %v469 = vpop.permute.xlu0 %468
    %470 = vrot.lane.b32.xlu0 %v368, 80
    %v471 = vpop.permute.xlu0 %470
    %v473 = vsel %vm171, %v469, 0
    %v476 = vsel %vm171, %v471, 0
    %478 = vmatprep.subr.bf16.mxu0 0
    %479 = vmatpush1.bf16.xpose.msra.mxu0 0
    %480 = vmatprep.subr.bf16.mxu0 0
    %481 = vmatpush1.bf16.xpose.msra.mxu0 0
    %482 = vmatprep.subr.bf16.mxu0 0
    %483 = vmatpush1.bf16.xpose.msra.mxu0 0
    %484 = vmatprep.subr.bf16.mxu0 0
    %485 = vmatpush1.bf16.xpose.msra.mxu0 0
    %486 = vmatprep.subr.bf16.mxu0 0
    %487 = vmatpush1.bf16.xpose.msra.mxu0 0
    %488 = vmatprep.subr.bf16.mxu0 0
    %489 = vmatpush1.bf16.xpose.msra.mxu0 0
    %490 = vmatprep.subr.bf16.mxu0 0
    %491 = vmatpush1.bf16.xpose.msra.mxu0 0
    %492 = vmatprep.subr.bf16.mxu0 0
    %493 = vmatpush1.bf16.xpose.msra.mxu0 %v476
    %494 = vmatprep.subr.bf16.mxu0 0
    %495 = vmatpush2.bf16.xpose.msra.mxu0 0
    %496 = vmatprep.subr.bf16.mxu0 0
    %497 = vmatpush2.bf16.xpose.msra.mxu0 0
    %498 = vmatprep.subr.bf16.mxu0 0
    %499 = vmatpush2.bf16.xpose.msra.mxu0 0
    %500 = vmatprep.subr.bf16.mxu0 0
    %501 = vmatpush2.bf16.xpose.msra.mxu0 0
    %502 = vmatprep.subr.bf16.mxu0 0
    %503 = vmatpush2.bf16.xpose.msra.mxu0 0
    %504 = vmatprep.subr.bf16.mxu0 0
    %505 = vmatpush2.bf16.xpose.msra.mxu0 0
    %506 = vmatprep.subr.bf16.mxu0 0
    %507 = vmatpush2.bf16.xpose.msra.mxu0 0
    %508 = vmatprep.subr.bf16.mxu0 0
    %509 = vmatpush2.bf16.xpose.msra.mxu0 0
    %510 = vmatprep.mubr.bf16.mxu0 0
    %511 = vmatmul.mubr.bf16.gmra.mxu0 %v473
    %v512 = vpop.f32.mrf.mxu0
    %v513 = vadd.f32 0.0, %v512
    %v514 = vpop.f32.mrf.mxu0
    %v515 = vpop.f32.mrf.mxu0
    %v516 = vpop.f32.mrf.mxu0
    %517 = vdwg.mxu0
    %518 = vrot.lane.b32.xlu0 %v368, 104
    %v519 = vpop.permute.xlu0 %518
    %520 = vrot.lane.b32.xlu0 %v368, 72
    %v521 = vpop.permute.xlu0 %520
    %v523 = vsel %vm171, %v519, 0
    %v526 = vsel %vm171, %v521, 0
    %528 = vmatprep.subr.bf16.mxu0 0
    %529 = vmatpush1.bf16.xpose.msra.mxu0 0
    %530 = vmatprep.subr.bf16.mxu0 0
    %531 = vmatpush1.bf16.xpose.msra.mxu0 0
    %532 = vmatprep.subr.bf16.mxu0 0
    %533 = vmatpush1.bf16.xpose.msra.mxu0 0
    %534 = vmatprep.subr.bf16.mxu0 0
    %535 = vmatpush1.bf16.xpose.msra.mxu0 0
    %536 = vmatprep.subr.bf16.mxu0 0
    %537 = vmatpush1.bf16.xpose.msra.mxu0 0
    %538 = vmatprep.subr.bf16.mxu0 0
    %539 = vmatpush1.bf16.xpose.msra.mxu0 0
    %540 = vmatprep.subr.bf16.mxu0 0
    %541 = vmatpush1.bf16.xpose.msra.mxu0 0
    %542 = vmatprep.subr.bf16.mxu0 0
    %543 = vmatpush1.bf16.xpose.msra.mxu0 %v526
    %544 = vmatprep.subr.bf16.mxu0 0
    %545 = vmatpush2.bf16.xpose.msra.mxu0 0
    %546 = vmatprep.subr.bf16.mxu0 0
    %547 = vmatpush2.bf16.xpose.msra.mxu0 0
    %548 = vmatprep.subr.bf16.mxu0 0
    %549 = vmatpush2.bf16.xpose.msra.mxu0 0
    %550 = vmatprep.subr.bf16.mxu0 0
    %551 = vmatpush2.bf16.xpose.msra.mxu0 0
    %552 = vmatprep.subr.bf16.mxu0 0
    %553 = vmatpush2.bf16.xpose.msra.mxu0 0
    %554 = vmatprep.subr.bf16.mxu0 0
    %555 = vmatpush2.bf16.xpose.msra.mxu0 0
    %556 = vmatprep.subr.bf16.mxu0 0
    %557 = vmatpush2.bf16.xpose.msra.mxu0 0
    %558 = vmatprep.subr.bf16.mxu0 0
    %559 = vmatpush2.bf16.xpose.msra.mxu0 0
    %560 = vmatprep.mubr.bf16.mxu0 0
    %561 = vmatmul.mubr.bf16.gmra.mxu0 %v523
    %v562 = vpop.f32.mrf.mxu0
    %v563 = vadd.f32 0.0, %v562
    %v564 = vpop.f32.mrf.mxu0
    %v565 = vpop.f32.mrf.mxu0
    %v566 = vpop.f32.mrf.mxu0
    %567 = vdwg.mxu0
    %v568 = vsel %vm166, %v213, -1.7014117e+38
    %v569 = vsel %vm171, %v568, -inf
    %570 = vmax.xlane.f32.xlu0 %v569
    %v571 = vpop.xlane.xlu0 %570
    %v572 = vsub.f32 %v568, %v571
    %v573 = vmul.f32 %v572, 1.442695
    %v574 = vpow.pop %v573
    %v575 = vsel %vm171, %v574, 0.0
    %576 = vadd.xlane.f32.xlu0 %v575
    %v577 = vpop.xlane.xlu0 %576
    %v578 = vrcp.pop %v577
    %v579 = vmul.f32 %v574, %v578
    %v580 = vpack.c.bf16 %v579, %v579
    %v581 = vsel %vm166, %v263, -1.7014117e+38
    %v582 = vsel %vm171, %v581, -inf
    %583 = vmax.xlane.f32.xlu0 %v582
    %v584 = vpop.xlane.xlu0 %583
    %v585 = vsub.f32 %v581, %v584
    %v586 = vmul.f32 %v585, 1.442695
    %v587 = vpow.pop %v586
    %v588 = vsel %vm171, %v587, 0.0
    %589 = vadd.xlane.f32.xlu0 %v588
    %v590 = vpop.xlane.xlu0 %589
    %v591 = vrcp.pop %v590
    %v592 = vmul.f32 %v587, %v591
    %v593 = vpack.c.bf16 %v592, %v592
    %v594 = vsel %vm166, %v313, -1.7014117e+38
    %v595 = vsel %vm171, %v594, -inf
    %596 = vmax.xlane.f32.xlu0 %v595
    %v597 = vpop.xlane.xlu0 %596
    %v598 = vsub.f32 %v594, %v597
    %v599 = vmul.f32 %v598, 1.442695
    %v600 = vpow.pop %v599
    %v601 = vsel %vm171, %v600, 0.0
    %602 = vadd.xlane.f32.xlu0 %v601
    %v603 = vpop.xlane.xlu0 %602
    %v604 = vrcp.pop %v603
    %v605 = vmul.f32 %v600, %v604
    %v606 = vpack.c.bf16 %v605, %v605
    %v607 = vsel %vm166, %v363, -1.7014117e+38
    %v608 = vsel %vm171, %v607, -inf
    %609 = vmax.xlane.f32.xlu0 %v608
    %v610 = vpop.xlane.xlu0 %609
    %v611 = vsub.f32 %v607, %v610
    %v612 = vmul.f32 %v611, 1.442695
    %v613 = vpow.pop %v612
    %v614 = vsel %vm171, %v613, 0.0
    %615 = vadd.xlane.f32.xlu0 %v614
    %v616 = vpop.xlane.xlu0 %615
    %v617 = vrcp.pop %v616
    %v618 = vmul.f32 %v613, %v617
    %v619 = vpack.c.bf16 %v618, %v618
    %v620 = vsel %vm166, %v413, -1.7014117e+38
    %v621 = vsel %vm171, %v620, -inf
    %622 = vmax.xlane.f32.xlu0 %v621
    %v623 = vpop.xlane.xlu0 %622
    %v624 = vsub.f32 %v620, %v623
    %v625 = vmul.f32 %v624, 1.442695
    %v626 = vpow.pop %v625
    %v627 = vsel %vm171, %v626, 0.0
    %628 = vadd.xlane.f32.xlu0 %v627
    %v629 = vpop.xlane.xlu0 %628
    %v630 = vrcp.pop %v629
    %v631 = vmul.f32 %v626, %v630
    %v632 = vpack.c.bf16 %v631, %v631
    %v633 = vsel %vm166, %v463, -1.7014117e+38
    %v634 = vsel %vm171, %v633, -inf
    %635 = vmax.xlane.f32.xlu0 %v634
    %v636 = vpop.xlane.xlu0 %635
    %v637 = vsub.f32 %v633, %v636
    %v638 = vmul.f32 %v637, 1.442695
    %v639 = vpow.pop %v638
    %v640 = vsel %vm171, %v639, 0.0
    %641 = vadd.xlane.f32.xlu0 %v640
    %v642 = vpop.xlane.xlu0 %641
    %v643 = vrcp.pop %v642
    %v644 = vmul.f32 %v639, %v643
    %v645 = vpack.c.bf16 %v644, %v644
    %v646 = vsel %vm166, %v513, -1.7014117e+38
    %v647 = vsel %vm171, %v646, -inf
    %648 = vmax.xlane.f32.xlu0 %v647
    %v649 = vpop.xlane.xlu0 %648
    %v650 = vsub.f32 %v646, %v649
    %v651 = vmul.f32 %v650, 1.442695
    %v652 = vpow.pop %v651
    %v653 = vsel %vm171, %v652, 0.0
    %654 = vadd.xlane.f32.xlu0 %v653
    %v655 = vpop.xlane.xlu0 %654
    %v656 = vrcp.pop %v655
    %v657 = vmul.f32 %v652, %v656
    %v658 = vpack.c.bf16 %v657, %v657
    %v659 = vsel %vm166, %v563, -1.7014117e+38
    %v660 = vsel %vm171, %v659, -inf
    %661 = vmax.xlane.f32.xlu0 %v660
    %v662 = vpop.xlane.xlu0 %661
    %v663 = vsub.f32 %v659, %v662
    %v664 = vmul.f32 %v663, 1.442695
    %v665 = vpow.pop %v664
    %v666 = vsel %vm171, %v665, 0.0
    %667 = vadd.xlane.f32.xlu0 %v666
    %v668 = vpop.xlane.xlu0 %667
    %v669 = vrcp.pop %v668
    %v670 = vmul.f32 %v665, %v669
    %v671 = vpack.c.bf16 %v670, %v670
    %v672 = vld [vmem:[%s5] sm:$0xf]
    %v673 = vld [vmem:[%s5 + $0x4] sm:$0xf]
    %v674 = vld [vmem:[%s5 + $0x8] sm:$0xf]
    %v675 = vld [vmem:[%s5 + $0xc] sm:$0xf]
    %676 = vrot.lane.b32.xlu0 %v167, 64
    %v677 = vpop.permute.xlu0 %676
    %v679 = vsel %vm171, %v580, 0
    %vm681 = vcmask 1043456
    %v683 = vsel %vm681, %v677, 0
    %685 = vmatprep.subr.bf16.mxu0 0
    %686 = vmatpush1.bf16.msra.mxu0 0
    %687 = vmatprep.subr.bf16.mxu0 0
    %688 = vmatpush1.bf16.msra.mxu0 0
    %689 = vmatprep.subr.bf16.mxu0 0
    %690 = vmatpush1.bf16.msra.mxu0 0
    %691 = vmatprep.subr.bf16.mxu0 0
    %692 = vmatpush1.bf16.msra.mxu0 0
    %693 = vmatprep.subr.bf16.mxu0 0
    %694 = vmatpush1.bf16.msra.mxu0 0
    %695 = vmatprep.subr.bf16.mxu0 0
    %696 = vmatpush1.bf16.msra.mxu0 0
    %697 = vmatprep.subr.bf16.mxu0 0
    %698 = vmatpush1.bf16.msra.mxu0 0
    %699 = vmatprep.subr.bf16.mxu0 0
    %700 = vmatpush1.bf16.msra.mxu0 %v683
    %701 = vmatprep.subr.bf16.mxu0 0
    %702 = vmatpush2.bf16.msra.mxu0 0
    %703 = vmatprep.subr.bf16.mxu0 0
    %704 = vmatpush2.bf16.msra.mxu0 0
    %705 = vmatprep.subr.bf16.mxu0 0
    %706 = vmatpush2.bf16.msra.mxu0 0
    %707 = vmatprep.subr.bf16.mxu0 0
    %708 = vmatpush2.bf16.msra.mxu0 0
    %709 = vmatprep.subr.bf16.mxu0 0
    %710 = vmatpush2.bf16.msra.mxu0 0
    %711 = vmatprep.subr.bf16.mxu0 0
    %712 = vmatpush2.bf16.msra.mxu0 0
    %713 = vmatprep.subr.bf16.mxu0 0
    %714 = vmatpush2.bf16.msra.mxu0 0
    %715 = vmatprep.subr.bf16.mxu0 0
    %716 = vmatpush2.bf16.msra.mxu0 0
    %717 = vmatprep.mubr.bf16.mxu0 0
    %718 = vmatmul.mubr.bf16.gmra.mxu0 %v679
    %v719 = vpop.f32.mrf.mxu0
    %v720 = vadd.f32 0.0, %v719
    %v721 = vpop.f32.mrf.mxu0
    %v722 = vpop.f32.mrf.mxu0
    %v723 = vpop.f32.mrf.mxu0
    %724 = vdwg.mxu0
    %v725 = vpack.c.bf16 %v720, %v720
    %726 = vrot.lane.b32.xlu0 %v167, 56
    %v727 = vpop.permute.xlu0 %726
    %v729 = vsel %vm171, %v593, 0
    %v732 = vsel %vm681, %v727, 0
    %734 = vmatprep.subr.bf16.mxu0 0
    %735 = vmatpush1.bf16.msra.mxu0 0
    %736 = vmatprep.subr.bf16.mxu0 0
    %737 = vmatpush1.bf16.msra.mxu0 0
    %738 = vmatprep.subr.bf16.mxu0 0
    %739 = vmatpush1.bf16.msra.mxu0 0
    %740 = vmatprep.subr.bf16.mxu0 0
    %741 = vmatpush1.bf16.msra.mxu0 0
    %742 = vmatprep.subr.bf16.mxu0 0
    %743 = vmatpush1.bf16.msra.mxu0 0
    %744 = vmatprep.subr.bf16.mxu0 0
    %745 = vmatpush1.bf16.msra.mxu0 0
    %746 = vmatprep.subr.bf16.mxu0 0
    %747 = vmatpush1.bf16.msra.mxu0 0
    %748 = vmatprep.subr.bf16.mxu0 0
    %749 = vmatpush1.bf16.msra.mxu0 %v732
    %750 = vmatprep.subr.bf16.mxu0 0
    %751 = vmatpush2.bf16.msra.mxu0 0
    %752 = vmatprep.subr.bf16.mxu0 0
    %753 = vmatpush2.bf16.msra.mxu0 0
    %754 = vmatprep.subr.bf16.mxu0 0
    %755 = vmatpush2.bf16.msra.mxu0 0
    %756 = vmatprep.subr.bf16.mxu0 0
    %757 = vmatpush2.bf16.msra.mxu0 0
    %758 = vmatprep.subr.bf16.mxu0 0
    %759 = vmatpush2.bf16.msra.mxu0 0
    %760 = vmatprep.subr.bf16.mxu0 0
    %761 = vmatpush2.bf16.msra.mxu0 0
    %762 = vmatprep.subr.bf16.mxu0 0
    %763 = vmatpush2.bf16.msra.mxu0 0
    %764 = vmatprep.subr.bf16.mxu0 0
    %765 = vmatpush2.bf16.msra.mxu0 0
    %766 = vmatprep.mubr.bf16.mxu0 0
    %767 = vmatmul.mubr.bf16.gmra.mxu0 %v729
    %v768 = vpop.f32.mrf.mxu0
    %v769 = vadd.f32 0.0, %v768
    %v770 = vpop.f32.mrf.mxu0
    %v771 = vpop.f32.mrf.mxu0
    %v772 = vpop.f32.mrf.mxu0
    %773 = vdwg.mxu0
    %v774 = vpack.c.bf16 %v769, %v769
    %v776 = vsel %vm171, %v774, 0
    %v779 = vsel %vm681, %v673, 0
    %781 = vmatprep.subr.bf16.mxu0 0
    %782 = vmatpush1.bf16.msra.mxu0 0
    %783 = vmatprep.subr.bf16.mxu0 0
    %784 = vmatpush1.bf16.msra.mxu0 0
    %785 = vmatprep.subr.bf16.mxu0 0
    %786 = vmatpush1.bf16.msra.mxu0 0
    %787 = vmatprep.subr.bf16.mxu0 0
    %788 = vmatpush1.bf16.msra.mxu0 0
    %789 = vmatprep.subr.bf16.mxu0 0
    %790 = vmatpush1.bf16.msra.mxu0 0
    %791 = vmatprep.subr.bf16.mxu0 0
    %792 = vmatpush1.bf16.msra.mxu0 0
    %793 = vmatprep.subr.bf16.mxu0 0
    %794 = vmatpush1.bf16.msra.mxu0 0
    %795 = vmatprep.subr.bf16.mxu0 0
    %796 = vmatpush1.bf16.msra.mxu0 %v779
    %797 = vmatprep.subr.bf16.mxu0 0
    %798 = vmatpush2.bf16.msra.mxu0 0
    %799 = vmatprep.subr.bf16.mxu0 0
    %800 = vmatpush2.bf16.msra.mxu0 0
    %801 = vmatprep.subr.bf16.mxu0 0
    %802 = vmatpush2.bf16.msra.mxu0 0
    %803 = vmatprep.subr.bf16.mxu0 0
    %804 = vmatpush2.bf16.msra.mxu0 0
    %805 = vmatprep.subr.bf16.mxu0 0
    %806 = vmatpush2.bf16.msra.mxu0 0
    %807 = vmatprep.subr.bf16.mxu0 0
    %808 = vmatpush2.bf16.msra.mxu0 0
    %809 = vmatprep.subr.bf16.mxu0 0
    %810 = vmatpush2.bf16.msra.mxu0 0
    %811 = vmatprep.subr.bf16.mxu0 0
    %812 = vmatpush2.bf16.msra.mxu0 0
    %813 = vmatprep.mubr.bf16.mxu0 0
    %814 = vmatmul.mubr.bf16.gmra.mxu0 %v776
    %v815 = vpop.f32.mrf.mxu0
    %v816 = vadd.f32 0.0, %v815
    %v817 = vpop.f32.mrf.mxu0
    %v818 = vpop.f32.mrf.mxu0
    %v819 = vpop.f32.mrf.mxu0
    %820 = vdwg.mxu0
    %v822 = vsel %vm171, %v725, 0
    %v825 = vsel %vm681, %v672, 0
    %827 = vmatprep.subr.bf16.mxu0 0
    %828 = vmatpush1.bf16.msra.mxu0 0
    %829 = vmatprep.subr.bf16.mxu0 0
    %830 = vmatpush1.bf16.msra.mxu0 0
    %831 = vmatprep.subr.bf16.mxu0 0
    %832 = vmatpush1.bf16.msra.mxu0 0
    %833 = vmatprep.subr.bf16.mxu0 0
    %834 = vmatpush1.bf16.msra.mxu0 0
    %835 = vmatprep.subr.bf16.mxu0 0
    %836 = vmatpush1.bf16.msra.mxu0 0
    %837 = vmatprep.subr.bf16.mxu0 0
    %838 = vmatpush1.bf16.msra.mxu0 0
    %839 = vmatprep.subr.bf16.mxu0 0
    %840 = vmatpush1.bf16.msra.mxu0 0
    %841 = vmatprep.subr.bf16.mxu0 0
    %842 = vmatpush1.bf16.msra.mxu0 %v825
    %843 = vmatprep.subr.bf16.mxu0 0
    %844 = vmatpush2.bf16.msra.mxu0 0
    %845 = vmatprep.subr.bf16.mxu0 0
    %846 = vmatpush2.bf16.msra.mxu0 0
    %847 = vmatprep.subr.bf16.mxu0 0
    %848 = vmatpush2.bf16.msra.mxu0 0
    %849 = vmatprep.subr.bf16.mxu0 0
    %850 = vmatpush2.bf16.msra.mxu0 0
    %851 = vmatprep.subr.bf16.mxu0 0
    %852 = vmatpush2.bf16.msra.mxu0 0
    %853 = vmatprep.subr.bf16.mxu0 0
    %854 = vmatpush2.bf16.msra.mxu0 0
    %855 = vmatprep.subr.bf16.mxu0 0
    %856 = vmatpush2.bf16.msra.mxu0 0
    %857 = vmatprep.subr.bf16.mxu0 0
    %858 = vmatpush2.bf16.msra.mxu0 0
    %859 = vmatprep.mubr.bf16.mxu0 0
    %860 = vmatmul.mubr.bf16.gmra.mxu0 %v822
    %v861 = vpop.f32.mrf.mxu0
    %v862 = vadd.f32 %v816, %v861
    %v863 = vpop.f32.mrf.mxu0
    %v864 = vpop.f32.mrf.mxu0
    %v865 = vpop.f32.mrf.mxu0
    %866 = vdwg.mxu0
    %867 = vrot.lane.b32.xlu0 %v167, 48
    %v868 = vpop.permute.xlu0 %867
    %v870 = vsel %vm171, %v606, 0
    %v873 = vsel %vm681, %v868, 0
    %875 = vmatprep.subr.bf16.mxu0 0
    %876 = vmatpush1.bf16.msra.mxu0 0
    %877 = vmatprep.subr.bf16.mxu0 0
    %878 = vmatpush1.bf16.msra.mxu0 0
    %879 = vmatprep.subr.bf16.mxu0 0
    %880 = vmatpush1.bf16.msra.mxu0 0
    %881 = vmatprep.subr.bf16.mxu0 0
    %882 = vmatpush1.bf16.msra.mxu0 0
    %883 = vmatprep.subr.bf16.mxu0 0
    %884 = vmatpush1.bf16.msra.mxu0 0
    %885 = vmatprep.subr.bf16.mxu0 0
    %886 = vmatpush1.bf16.msra.mxu0 0
    %887 = vmatprep.subr.bf16.mxu0 0
    %888 = vmatpush1.bf16.msra.mxu0 0
    %889 = vmatprep.subr.bf16.mxu0 0
    %890 = vmatpush1.bf16.msra.mxu0 %v873
    %891 = vmatprep.subr.bf16.mxu0 0
    %892 = vmatpush2.bf16.msra.mxu0 0
    %893 = vmatprep.subr.bf16.mxu0 0
    %894 = vmatpush2.bf16.msra.mxu0 0
    %895 = vmatprep.subr.bf16.mxu0 0
    %896 = vmatpush2.bf16.msra.mxu0 0
    %897 = vmatprep.subr.bf16.mxu0 0
    %898 = vmatpush2.bf16.msra.mxu0 0
    %899 = vmatprep.subr.bf16.mxu0 0
    %900 = vmatpush2.bf16.msra.mxu0 0
    %901 = vmatprep.subr.bf16.mxu0 0
    %902 = vmatpush2.bf16.msra.mxu0 0
    %903 = vmatprep.subr.bf16.mxu0 0
    %904 = vmatpush2.bf16.msra.mxu0 0
    %905 = vmatprep.subr.bf16.mxu0 0
    %906 = vmatpush2.bf16.msra.mxu0 0
    %907 = vmatprep.mubr.bf16.mxu0 0
    %908 = vmatmul.mubr.bf16.gmra.mxu0 %v870
    %v909 = vpop.f32.mrf.mxu0
    %v910 = vadd.f32 0.0, %v909
    %v911 = vpop.f32.mrf.mxu0
    %v912 = vpop.f32.mrf.mxu0
    %v913 = vpop.f32.mrf.mxu0
    %914 = vdwg.mxu0
    %v915 = vpack.c.bf16 %v910, %v910
    %v917 = vsel %vm171, %v915, 0
    %v920 = vsel %vm681, %v674, 0
    %922 = vmatprep.subr.bf16.mxu0 0
    %923 = vmatpush1.bf16.msra.mxu0 0
    %924 = vmatprep.subr.bf16.mxu0 0
    %925 = vmatpush1.bf16.msra.mxu0 0
    %926 = vmatprep.subr.bf16.mxu0 0
    %927 = vmatpush1.bf16.msra.mxu0 0
    %928 = vmatprep.subr.bf16.mxu0 0
    %929 = vmatpush1.bf16.msra.mxu0 0
    %930 = vmatprep.subr.bf16.mxu0 0
    %931 = vmatpush1.bf16.msra.mxu0 0
    %932 = vmatprep.subr.bf16.mxu0 0
    %933 = vmatpush1.bf16.msra.mxu0 0
    %934 = vmatprep.subr.bf16.mxu0 0
    %935 = vmatpush1.bf16.msra.mxu0 0
    %936 = vmatprep.subr.bf16.mxu0 0
    %937 = vmatpush1.bf16.msra.mxu0 %v920
    %938 = vmatprep.subr.bf16.mxu0 0
    %939 = vmatpush2.bf16.msra.mxu0 0
    %940 = vmatprep.subr.bf16.mxu0 0
    %941 = vmatpush2.bf16.msra.mxu0 0
    %942 = vmatprep.subr.bf16.mxu0 0
    %943 = vmatpush2.bf16.msra.mxu0 0
    %944 = vmatprep.subr.bf16.mxu0 0
    %945 = vmatpush2.bf16.msra.mxu0 0
    %946 = vmatprep.subr.bf16.mxu0 0
    %947 = vmatpush2.bf16.msra.mxu0 0
    %948 = vmatprep.subr.bf16.mxu0 0
    %949 = vmatpush2.bf16.msra.mxu0 0
    %950 = vmatprep.subr.bf16.mxu0 0
    %951 = vmatpush2.bf16.msra.mxu0 0
    %952 = vmatprep.subr.bf16.mxu0 0
    %953 = vmatpush2.bf16.msra.mxu0 0
    %954 = vmatprep.mubr.bf16.mxu0 0
    %955 = vmatmul.mubr.bf16.gmra.mxu0 %v917
    %v956 = vpop.f32.mrf.mxu0
    %v957 = vadd.f32 0.0, %v956
    %v958 = vpop.f32.mrf.mxu0
    %v959 = vpop.f32.mrf.mxu0
    %v960 = vpop.f32.mrf.mxu0
    %961 = vdwg.mxu0
    %v962 = vadd.f32 %v862, %v957
    %963 = vrot.lane.b32.xlu0 %v167, 40
    %v964 = vpop.permute.xlu0 %963
    %v966 = vsel %vm171, %v619, 0
    %v969 = vsel %vm681, %v964, 0
    %971 = vmatprep.subr.bf16.mxu0 0
    %972 = vmatpush1.bf16.msra.mxu0 0
    %973 = vmatprep.subr.bf16.mxu0 0
    %974 = vmatpush1.bf16.msra.mxu0 0
    %975 = vmatprep.subr.bf16.mxu0 0
    %976 = vmatpush1.bf16.msra.mxu0 0
    %977 = vmatprep.subr.bf16.mxu0 0
    %978 = vmatpush1.bf16.msra.mxu0 0
    %979 = vmatprep.subr.bf16.mxu0 0
    %980 = vmatpush1.bf16.msra.mxu0 0
    %981 = vmatprep.subr.bf16.mxu0 0
    %982 = vmatpush1.bf16.msra.mxu0 0
    %983 = vmatprep.subr.bf16.mxu0 0
    %984 = vmatpush1.bf16.msra.mxu0 0
    %985 = vmatprep.subr.bf16.mxu0 0
    %986 = vmatpush1.bf16.msra.mxu0 %v969
    %987 = vmatprep.subr.bf16.mxu0 0
    %988 = vmatpush2.bf16.msra.mxu0 0
    %989 = vmatprep.subr.bf16.mxu0 0
    %990 = vmatpush2.bf16.msra.mxu0 0
    %991 = vmatprep.subr.bf16.mxu0 0
    %992 = vmatpush2.bf16.msra.mxu0 0
    %993 = vmatprep.subr.bf16.mxu0 0
    %994 = vmatpush2.bf16.msra.mxu0 0
    %995 = vmatprep.subr.bf16.mxu0 0
    %996 = vmatpush2.bf16.msra.mxu0 0
    %997 = vmatprep.subr.bf16.mxu0 0
    %998 = vmatpush2.bf16.msra.mxu0 0
    %999 = vmatprep.subr.bf16.mxu0 0
    %1000 = vmatpush2.bf16.msra.mxu0 0
    %1001 = vmatprep.subr.bf16.mxu0 0
    %1002 = vmatpush2.bf16.msra.mxu0 0
    %1003 = vmatprep.mubr.bf16.mxu0 0
    %1004 = vmatmul.mubr.bf16.gmra.mxu0 %v966
    %v1005 = vpop.f32.mrf.mxu0
    %v1006 = vadd.f32 0.0, %v1005
    %v1007 = vpop.f32.mrf.mxu0
    %v1008 = vpop.f32.mrf.mxu0
    %v1009 = vpop.f32.mrf.mxu0
    %1010 = vdwg.mxu0
    %v1011 = vpack.c.bf16 %v1006, %v1006
    %v1013 = vsel %vm171, %v1011, 0
    %v1016 = vsel %vm681, %v675, 0
    %1018 = vmatprep.subr.bf16.mxu0 0
    %1019 = vmatpush1.bf16.msra.mxu0 0
    %1020 = vmatprep.subr.bf16.mxu0 0
    %1021 = vmatpush1.bf16.msra.mxu0 0
    %1022 = vmatprep.subr.bf16.mxu0 0
    %1023 = vmatpush1.bf16.msra.mxu0 0
    %1024 = vmatprep.subr.bf16.mxu0 0
    %1025 = vmatpush1.bf16.msra.mxu0 0
    %1026 = vmatprep.subr.bf16.mxu0 0
    %1027 = vmatpush1.bf16.msra.mxu0 0
    %1028 = vmatprep.subr.bf16.mxu0 0
    %1029 = vmatpush1.bf16.msra.mxu0 0
    %1030 = vmatprep.subr.bf16.mxu0 0
    %1031 = vmatpush1.bf16.msra.mxu0 0
    %1032 = vmatprep.subr.bf16.mxu0 0
    %1033 = vmatpush1.bf16.msra.mxu0 %v1016
    %1034 = vmatprep.subr.bf16.mxu0 0
    %1035 = vmatpush2.bf16.msra.mxu0 0
    %1036 = vmatprep.subr.bf16.mxu0 0
    %1037 = vmatpush2.bf16.msra.mxu0 0
    %1038 = vmatprep.subr.bf16.mxu0 0
    %1039 = vmatpush2.bf16.msra.mxu0 0
    %1040 = vmatprep.subr.bf16.mxu0 0
    %1041 = vmatpush2.bf16.msra.mxu0 0
    %1042 = vmatprep.subr.bf16.mxu0 0
    %1043 = vmatpush2.bf16.msra.mxu0 0
    %1044 = vmatprep.subr.bf16.mxu0 0
    %1045 = vmatpush2.bf16.msra.mxu0 0
    %1046 = vmatprep.subr.bf16.mxu0 0
    %1047 = vmatpush2.bf16.msra.mxu0 0
    %1048 = vmatprep.subr.bf16.mxu0 0
    %1049 = vmatpush2.bf16.msra.mxu0 0
    %1050 = vmatprep.mubr.bf16.mxu0 0
    %1051 = vmatmul.mubr.bf16.gmra.mxu0 %v1013
    %v1052 = vpop.f32.mrf.mxu0
    %v1053 = vadd.f32 0.0, %v1052
    %v1054 = vpop.f32.mrf.mxu0
    %v1055 = vpop.f32.mrf.mxu0
    %v1056 = vpop.f32.mrf.mxu0
    %1057 = vdwg.mxu0
    %v1058 = vadd.f32 %v962, %v1053
    %1059 = vst.msk [vmem:[#allocation2] sm:$0xff] %vm50, %v1058
    %1060 = vrot.lane.b32.xlu0 %v368, 64
    %v1061 = vpop.permute.xlu0 %1060
    %v1063 = vsel %vm171, %v632, 0
    %v1066 = vsel %vm681, %v1061, 0
    %1068 = vmatprep.subr.bf16.mxu0 0
    %1069 = vmatpush1.bf16.msra.mxu0 0
    %1070 = vmatprep.subr.bf16.mxu0 0
    %1071 = vmatpush1.bf16.msra.mxu0 0
    %1072 = vmatprep.subr.bf16.mxu0 0
    %1073 = vmatpush1.bf16.msra.mxu0 0
    %1074 = vmatprep.subr.bf16.mxu0 0
    %1075 = vmatpush1.bf16.msra.mxu0 0
    %1076 = vmatprep.subr.bf16.mxu0 0
    %1077 = vmatpush1.bf16.msra.mxu0 0
    %1078 = vmatprep.subr.bf16.mxu0 0
    %1079 = vmatpush1.bf16.msra.mxu0 0
    %1080 = vmatprep.subr.bf16.mxu0 0
    %1081 = vmatpush1.bf16.msra.mxu0 0
    %1082 = vmatprep.subr.bf16.mxu0 0
    %1083 = vmatpush1.bf16.msra.mxu0 %v1066
    %1084 = vmatprep.subr.bf16.mxu0 0
    %1085 = vmatpush2.bf16.msra.mxu0 0
    %1086 = vmatprep.subr.bf16.mxu0 0
    %1087 = vmatpush2.bf16.msra.mxu0 0
    %1088 = vmatprep.subr.bf16.mxu0 0
    %1089 = vmatpush2.bf16.msra.mxu0 0
    %1090 = vmatprep.subr.bf16.mxu0 0
    %1091 = vmatpush2.bf16.msra.mxu0 0
    %1092 = vmatprep.subr.bf16.mxu0 0
    %1093 = vmatpush2.bf16.msra.mxu0 0
    %1094 = vmatprep.subr.bf16.mxu0 0
    %1095 = vmatpush2.bf16.msra.mxu0 0
    %1096 = vmatprep.subr.bf16.mxu0 0
    %1097 = vmatpush2.bf16.msra.mxu0 0
    %1098 = vmatprep.subr.bf16.mxu0 0
    %1099 = vmatpush2.bf16.msra.mxu0 0
    %1100 = vmatprep.mubr.bf16.mxu0 0
    %1101 = vmatmul.mubr.bf16.gmra.mxu0 %v1063
    %v1102 = vpop.f32.mrf.mxu0
    %v1103 = vadd.f32 0.0, %v1102
    %v1104 = vpop.f32.mrf.mxu0
    %v1105 = vpop.f32.mrf.mxu0
    %v1106 = vpop.f32.mrf.mxu0
    %1107 = vdwg.mxu0
    %v1108 = vpack.c.bf16 %v1103, %v1103
    %1109 = vrot.lane.b32.xlu0 %v368, 56
    %v1110 = vpop.permute.xlu0 %1109
    %v1112 = vsel %vm171, %v645, 0
    %v1115 = vsel %vm681, %v1110, 0
    %1117 = vmatprep.subr.bf16.mxu0 0
    %1118 = vmatpush1.bf16.msra.mxu0 0
    %1119 = vmatprep.subr.bf16.mxu0 0
    %1120 = vmatpush1.bf16.msra.mxu0 0
    %1121 = vmatprep.subr.bf16.mxu0 0
    %1122 = vmatpush1.bf16.msra.mxu0 0
    %1123 = vmatprep.subr.bf16.mxu0 0
    %1124 = vmatpush1.bf16.msra.mxu0 0
    %1125 = vmatprep.subr.bf16.mxu0 0
    %1126 = vmatpush1.bf16.msra.mxu0 0
    %1127 = vmatprep.subr.bf16.mxu0 0
    %1128 = vmatpush1.bf16.msra.mxu0 0
    %1129 = vmatprep.subr.bf16.mxu0 0
    %1130 = vmatpush1.bf16.msra.mxu0 0
    %1131 = vmatprep.subr.bf16.mxu0 0
    %1132 = vmatpush1.bf16.msra.mxu0 %v1115
    %1133 = vmatprep.subr.bf16.mxu0 0
    %1134 = vmatpush2.bf16.msra.mxu0 0
    %1135 = vmatprep.subr.bf16.mxu0 0
    %1136 = vmatpush2.bf16.msra.mxu0 0
    %1137 = vmatprep.subr.bf16.mxu0 0
    %1138 = vmatpush2.bf16.msra.mxu0 0
    %1139 = vmatprep.subr.bf16.mxu0 0
    %1140 = vmatpush2.bf16.msra.mxu0 0
    %1141 = vmatprep.subr.bf16.mxu0 0
    %1142 = vmatpush2.bf16.msra.mxu0 0
    %1143 = vmatprep.subr.bf16.mxu0 0
    %1144 = vmatpush2.bf16.msra.mxu0 0
    %1145 = vmatprep.subr.bf16.mxu0 0
    %1146 = vmatpush2.bf16.msra.mxu0 0
    %1147 = vmatprep.subr.bf16.mxu0 0
    %1148 = vmatpush2.bf16.msra.mxu0 0
    %1149 = vmatprep.mubr.bf16.mxu0 0
    %1150 = vmatmul.mubr.bf16.gmra.mxu0 %v1112
    %v1151 = vpop.f32.mrf.mxu0
    %v1152 = vadd.f32 0.0, %v1151
    %v1153 = vpop.f32.mrf.mxu0
    %v1154 = vpop.f32.mrf.mxu0
    %v1155 = vpop.f32.mrf.mxu0
    %1156 = vdwg.mxu0
    %v1157 = vpack.c.bf16 %v1152, %v1152
    %v1159 = vsel %vm171, %v1157, 0
    %1161 = vmatprep.subr.bf16.mxu0 0
    %1162 = vmatpush1.bf16.msra.mxu0 0
    %1163 = vmatprep.subr.bf16.mxu0 0
    %1164 = vmatpush1.bf16.msra.mxu0 0
    %1165 = vmatprep.subr.bf16.mxu0 0
    %1166 = vmatpush1.bf16.msra.mxu0 0
    %1167 = vmatprep.subr.bf16.mxu0 0
    %1168 = vmatpush1.bf16.msra.mxu0 0
    %1169 = vmatprep.subr.bf16.mxu0 0
    %1170 = vmatpush1.bf16.msra.mxu0 0
    %1171 = vmatprep.subr.bf16.mxu0 0
    %1172 = vmatpush1.bf16.msra.mxu0 0
    %1173 = vmatprep.subr.bf16.mxu0 0
    %1174 = vmatpush1.bf16.msra.mxu0 0
    %1175 = vmatprep.subr.bf16.mxu0 0
    %1176 = vmatpush1.bf16.msra.mxu0 %v779
    %1177 = vmatprep.subr.bf16.mxu0 0
    %1178 = vmatpush2.bf16.msra.mxu0 0
    %1179 = vmatprep.subr.bf16.mxu0 0
    %1180 = vmatpush2.bf16.msra.mxu0 0
    %1181 = vmatprep.subr.bf16.mxu0 0
    %1182 = vmatpush2.bf16.msra.mxu0 0
    %1183 = vmatprep.subr.bf16.mxu0 0
    %1184 = vmatpush2.bf16.msra.mxu0 0
    %1185 = vmatprep.subr.bf16.mxu0 0
    %1186 = vmatpush2.bf16.msra.mxu0 0
    %1187 = vmatprep.subr.bf16.mxu0 0
    %1188 = vmatpush2.bf16.msra.mxu0 0
    %1189 = vmatprep.subr.bf16.mxu0 0
    %1190 = vmatpush2.bf16.msra.mxu0 0
    %1191 = vmatprep.subr.bf16.mxu0 0
    %1192 = vmatpush2.bf16.msra.mxu0 0
    %1193 = vmatprep.mubr.bf16.mxu0 0
    %1194 = vmatmul.mubr.bf16.gmra.mxu0 %v1159
    %v1195 = vpop.f32.mrf.mxu0
    %v1196 = vadd.f32 0.0, %v1195
    %v1197 = vpop.f32.mrf.mxu0
    %v1198 = vpop.f32.mrf.mxu0
    %v1199 = vpop.f32.mrf.mxu0
    %1200 = vdwg.mxu0
    %v1202 = vsel %vm171, %v1108, 0
    %1204 = vmatprep.subr.bf16.mxu0 0
    %1205 = vmatpush1.bf16.msra.mxu0 0
    %1206 = vmatprep.subr.bf16.mxu0 0
    %1207 = vmatpush1.bf16.msra.mxu0 0
    %1208 = vmatprep.subr.bf16.mxu0 0
    %1209 = vmatpush1.bf16.msra.mxu0 0
    %1210 = vmatprep.subr.bf16.mxu0 0
    %1211 = vmatpush1.bf16.msra.mxu0 0
    %1212 = vmatprep.subr.bf16.mxu0 0
    %1213 = vmatpush1.bf16.msra.mxu0 0
    %1214 = vmatprep.subr.bf16.mxu0 0
    %1215 = vmatpush1.bf16.msra.mxu0 0
    %1216 = vmatprep.subr.bf16.mxu0 0
    %1217 = vmatpush1.bf16.msra.mxu0 0
    %1218 = vmatprep.subr.bf16.mxu0 0
    %1219 = vmatpush1.bf16.msra.mxu0 %v825
    %1220 = vmatprep.subr.bf16.mxu0 0
    %1221 = vmatpush2.bf16.msra.mxu0 0
    %1222 = vmatprep.subr.bf16.mxu0 0
    %1223 = vmatpush2.bf16.msra.mxu0 0
    %1224 = vmatprep.subr.bf16.mxu0 0
    %1225 = vmatpush2.bf16.msra.mxu0 0
    %1226 = vmatprep.subr.bf16.mxu0 0
    %1227 = vmatpush2.bf16.msra.mxu0 0
    %1228 = vmatprep.subr.bf16.mxu0 0
    %1229 = vmatpush2.bf16.msra.mxu0 0
    %1230 = vmatprep.subr.bf16.mxu0 0
    %1231 = vmatpush2.bf16.msra.mxu0 0
    %1232 = vmatprep.subr.bf16.mxu0 0
    %1233 = vmatpush2.bf16.msra.mxu0 0
    %1234 = vmatprep.subr.bf16.mxu0 0
    %1235 = vmatpush2.bf16.msra.mxu0 0
    %1236 = vmatprep.mubr.bf16.mxu0 0
    %1237 = vmatmul.mubr.bf16.gmra.mxu0 %v1202
    %v1238 = vpop.f32.mrf.mxu0
    %v1239 = vadd.f32 %v1196, %v1238
    %v1240 = vpop.f32.mrf.mxu0
    %v1241 = vpop.f32.mrf.mxu0
    %v1242 = vpop.f32.mrf.mxu0
    %1243 = vdwg.mxu0
    %1244 = vrot.lane.b32.xlu0 %v368, 48
    %v1245 = vpop.permute.xlu0 %1244
    %v1247 = vsel %vm171, %v658, 0
    %v1250 = vsel %vm681, %v1245, 0
    %1252 = vmatprep.subr.bf16.mxu0 0
    %1253 = vmatpush1.bf16.msra.mxu0 0
    %1254 = vmatprep.subr.bf16.mxu0 0
    %1255 = vmatpush1.bf16.msra.mxu0 0
    %1256 = vmatprep.subr.bf16.mxu0 0
    %1257 = vmatpush1.bf16.msra.mxu0 0
    %1258 = vmatprep.subr.bf16.mxu0 0
    %1259 = vmatpush1.bf16.msra.mxu0 0
    %1260 = vmatprep.subr.bf16.mxu0 0
    %1261 = vmatpush1.bf16.msra.mxu0 0
    %1262 = vmatprep.subr.bf16.mxu0 0
    %1263 = vmatpush1.bf16.msra.mxu0 0
    %1264 = vmatprep.subr.bf16.mxu0 0
    %1265 = vmatpush1.bf16.msra.mxu0 0
    %1266 = vmatprep.subr.bf16.mxu0 0
    %1267 = vmatpush1.bf16.msra.mxu0 %v1250
    %1268 = vmatprep.subr.bf16.mxu0 0
    %1269 = vmatpush2.bf16.msra.mxu0 0
    %1270 = vmatprep.subr.bf16.mxu0 0
    %1271 = vmatpush2.bf16.msra.mxu0 0
    %1272 = vmatprep.subr.bf16.mxu0 0
    %1273 = vmatpush2.bf16.msra.mxu0 0
    %1274 = vmatprep.subr.bf16.mxu0 0
    %1275 = vmatpush2.bf16.msra.mxu0 0
    %1276 = vmatprep.subr.bf16.mxu0 0
    %1277 = vmatpush2.bf16.msra.mxu0 0
    %1278 = vmatprep.subr.bf16.mxu0 0
    %1279 = vmatpush2.bf16.msra.mxu0 0
    %1280 = vmatprep.subr.bf16.mxu0 0
    %1281 = vmatpush2.bf16.msra.mxu0 0
    %1282 = vmatprep.subr.bf16.mxu0 0
    %1283 = vmatpush2.bf16.msra.mxu0 0
    %1284 = vmatprep.mubr.bf16.mxu0 0
    %1285 = vmatmul.mubr.bf16.gmra.mxu0 %v1247
    %v1286 = vpop.f32.mrf.mxu0
    %v1287 = vadd.f32 0.0, %v1286
    %v1288 = vpop.f32.mrf.mxu0
    %v1289 = vpop.f32.mrf.mxu0
    %v1290 = vpop.f32.mrf.mxu0
    %1291 = vdwg.mxu0
    %v1292 = vpack.c.bf16 %v1287, %v1287
    %v1294 = vsel %vm171, %v1292, 0
    %1296 = vmatprep.subr.bf16.mxu0 0
    %1297 = vmatpush1.bf16.msra.mxu0 0
    %1298 = vmatprep.subr.bf16.mxu0 0
    %1299 = vmatpush1.bf16.msra.mxu0 0
    %1300 = vmatprep.subr.bf16.mxu0 0
    %1301 = vmatpush1.bf16.msra.mxu0 0
    %1302 = vmatprep.subr.bf16.mxu0 0
    %1303 = vmatpush1.bf16.msra.mxu0 0
    %1304 = vmatprep.subr.bf16.mxu0 0
    %1305 = vmatpush1.bf16.msra.mxu0 0
    %1306 = vmatprep.subr.bf16.mxu0 0
    %1307 = vmatpush1.bf16.msra.mxu0 0
    %1308 = vmatprep.subr.bf16.mxu0 0
    %1309 = vmatpush1.bf16.msra.mxu0 0
    %1310 = vmatprep.subr.bf16.mxu0 0
    %1311 = vmatpush1.bf16.msra.mxu0 %v920
    %1312 = vmatprep.subr.bf16.mxu0 0
    %1313 = vmatpush2.bf16.msra.mxu0 0
    %1314 = vmatprep.subr.bf16.mxu0 0
    %1315 = vmatpush2.bf16.msra.mxu0 0
    %1316 = vmatprep.subr.bf16.mxu0 0
    %1317 = vmatpush2.bf16.msra.mxu0 0
    %1318 = vmatprep.subr.bf16.mxu0 0
    %1319 = vmatpush2.bf16.msra.mxu0 0
    %1320 = vmatprep.subr.bf16.mxu0 0
    %1321 = vmatpush2.bf16.msra.mxu0 0
    %1322 = vmatprep.subr.bf16.mxu0 0
    %1323 = vmatpush2.bf16.msra.mxu0 0
    %1324 = vmatprep.subr.bf16.mxu0 0
    %1325 = vmatpush2.bf16.msra.mxu0 0
    %1326 = vmatprep.subr.bf16.mxu0 0
    %1327 = vmatpush2.bf16.msra.mxu0 0
    %1328 = vmatprep.mubr.bf16.mxu0 0
    %1329 = vmatmul.mubr.bf16.gmra.mxu0 %v1294
    %v1330 = vpop.f32.mrf.mxu0
    %v1331 = vadd.f32 0.0, %v1330
    %v1332 = vpop.f32.mrf.mxu0
    %v1333 = vpop.f32.mrf.mxu0
    %v1334 = vpop.f32.mrf.mxu0
    %1335 = vdwg.mxu0
    %v1336 = vadd.f32 %v1239, %v1331
    %1337 = vrot.lane.b32.xlu0 %v368, 40
    %v1338 = vpop.permute.xlu0 %1337
    %v1340 = vsel %vm171, %v671, 0
    %v1343 = vsel %vm681, %v1338, 0
    %1345 = vmatprep.subr.bf16.mxu0 0
    %1346 = vmatpush1.bf16.msra.mxu0 0
    %1347 = vmatprep.subr.bf16.mxu0 0
    %1348 = vmatpush1.bf16.msra.mxu0 0
    %1349 = vmatprep.subr.bf16.mxu0 0
    %1350 = vmatpush1.bf16.msra.mxu0 0
    %1351 = vmatprep.subr.bf16.mxu0 0
    %1352 = vmatpush1.bf16.msra.mxu0 0
    %1353 = vmatprep.subr.bf16.mxu0 0
    %1354 = vmatpush1.bf16.msra.mxu0 0
    %1355 = vmatprep.subr.bf16.mxu0 0
    %1356 = vmatpush1.bf16.msra.mxu0 0
    %1357 = vmatprep.subr.bf16.mxu0 0
    %1358 = vmatpush1.bf16.msra.mxu0 0
    %1359 = vmatprep.subr.bf16.mxu0 0
    %1360 = vmatpush1.bf16.msra.mxu0 %v1343
    %1361 = vmatprep.subr.bf16.mxu0 0
    %1362 = vmatpush2.bf16.msra.mxu0 0
    %1363 = vmatprep.subr.bf16.mxu0 0
    %1364 = vmatpush2.bf16.msra.mxu0 0
    %1365 = vmatprep.subr.bf16.mxu0 0
    %1366 = vmatpush2.bf16.msra.mxu0 0
    %1367 = vmatprep.subr.bf16.mxu0 0
    %1368 = vmatpush2.bf16.msra.mxu0 0
    %1369 = vmatprep.subr.bf16.mxu0 0
    %1370 = vmatpush2.bf16.msra.mxu0 0
    %1371 = vmatprep.subr.bf16.mxu0 0
    %1372 = vmatpush2.bf16.msra.mxu0 0
    %1373 = vmatprep.subr.bf16.mxu0 0
    %1374 = vmatpush2.bf16.msra.mxu0 0
    %1375 = vmatprep.subr.bf16.mxu0 0
    %1376 = vmatpush2.bf16.msra.mxu0 0
    %1377 = vmatprep.mubr.bf16.mxu0 0
    %1378 = vmatmul.mubr.bf16.gmra.mxu0 %v1340
    %v1379 = vpop.f32.mrf.mxu0
    %v1380 = vadd.f32 0.0, %v1379
    %v1381 = vpop.f32.mrf.mxu0
    %v1382 = vpop.f32.mrf.mxu0
    %v1383 = vpop.f32.mrf.mxu0
    %1384 = vdwg.mxu0
    %v1385 = vpack.c.bf16 %v1380, %v1380
    %v1387 = vsel %vm171, %v1385, 0
    %1389 = vmatprep.subr.bf16.mxu0 0
    %1390 = vmatpush1.bf16.msra.mxu0 0
    %1391 = vmatprep.subr.bf16.mxu0 0
    %1392 = vmatpush1.bf16.msra.mxu0 0
    %1393 = vmatprep.subr.bf16.mxu0 0
    %1394 = vmatpush1.bf16.msra.mxu0 0
    %1395 = vmatprep.subr.bf16.mxu0 0
    %1396 = vmatpush1.bf16.msra.mxu0 0
    %1397 = vmatprep.subr.bf16.mxu0 0
    %1398 = vmatpush1.bf16.msra.mxu0 0
    %1399 = vmatprep.subr.bf16.mxu0 0
    %1400 = vmatpush1.bf16.msra.mxu0 0
    %1401 = vmatprep.subr.bf16.mxu0 0
    %1402 = vmatpush1.bf16.msra.mxu0 0
    %1403 = vmatprep.subr.bf16.mxu0 0
    %1404 = vmatpush1.bf16.msra.mxu0 %v1016
    %1405 = vmatprep.subr.bf16.mxu0 0
    %1406 = vmatpush2.bf16.msra.mxu0 0
    %1407 = vmatprep.subr.bf16.mxu0 0
    %1408 = vmatpush2.bf16.msra.mxu0 0
    %1409 = vmatprep.subr.bf16.mxu0 0
    %1410 = vmatpush2.bf16.msra.mxu0 0
    %1411 = vmatprep.subr.bf16.mxu0 0
    %1412 = vmatpush2.bf16.msra.mxu0 0
    %1413 = vmatprep.subr.bf16.mxu0 0
    %1414 = vmatpush2.bf16.msra.mxu0 0
    %1415 = vmatprep.subr.bf16.mxu0 0
    %1416 = vmatpush2.bf16.msra.mxu0 0
    %1417 = vmatprep.subr.bf16.mxu0 0
    %1418 = vmatpush2.bf16.msra.mxu0 0
    %1419 = vmatprep.subr.bf16.mxu0 0
    %1420 = vmatpush2.bf16.msra.mxu0 0
    %1421 = vmatprep.mubr.bf16.mxu0 0
    %1422 = vmatmul.mubr.bf16.gmra.mxu0 %v1387
    %v1423 = vpop.f32.mrf.mxu0
    %v1424 = vadd.f32 0.0, %v1423
    %v1425 = vpop.f32.mrf.mxu0
    %v1426 = vpop.f32.mrf.mxu0
    %v1427 = vpop.f32.mrf.mxu0
    %1428 = vdwg.mxu0
    %v1429 = vadd.f32 %v1336, %v1424
    %1430 = vst.msk [vmem:[#allocation2 + $0x8] sm:$0xff] %vm50, %v1429
    %v1431 = vld [vmem:[#allocation2] sm:$0xff]
    %v1432 = vld [vmem:[#allocation2 + $0x8] sm:$0xff]
    %v1433 = vadd.f32 %v46, %v1431
    %v1434 = vadd.f32 %v47, %v1432
    %v1435 = vld [vmem:[%s6] sm:$0x1]
    %v1437 = vlaneseq
    %v1438 = vshrl.u32 %v1437, 7
    %v1439 = vsub.s32 0, %v1438
    %v1440 = vrot.slane %v1435, %v1439
    %v1442 = vadd.f32 %v1433, %v1440
    %v1443 = vadd.f32 %v1434, %v1440
    %v1444 = vld [vmem:[%s7] sm:$0x1]
    %v1445 = vld [vmem:[%s8] sm:$0x1]
    %v1446 = vsel %vm50, %v1442, 0.0
    %1447 = vadd.xlane.f32.xlu0 %v1446
    %v1448 = vpop.xlane.xlu0 %1447
    %v1449 = vsel %vm50, %v1443, 0.0
    %1450 = vadd.xlane.f32.xlu0 %v1449
    %v1451 = vpop.xlane.xlu0 %1450
    %v1452 = vmul.f32 %v1448, %v57
    %v1453 = vmul.f32 %v1451, %v57
    %v1454 = vsub.f32 %v1442, %v1452
    %v1455 = vsub.f32 %v1443, %v1453
    %v1456 = vmul.f32 %v1454, %v1454
    %v1457 = vmul.f32 %v1455, %v1455
    %v1458 = vsel %vm50, %v1456, 0.0
    %1459 = vadd.xlane.f32.xlu0 %v1458
    %v1460 = vpop.xlane.xlu0 %1459
    %v1461 = vsel %vm50, %v1457, 0.0
    %1462 = vadd.xlane.f32.xlu0 %v1461
    %v1463 = vpop.xlane.xlu0 %1462
    %v1464 = vmul.f32 %v1460, %v57
    %v1465 = vmul.f32 %v1463, %v57
    %v1466 = vadd.f32 %v1464, 1e-05
    %v1467 = vadd.f32 %v1465, 1e-05
    %v1468 = vrsqrt.pop %v1466
    %v1469 = vrsqrt.pop %v1467
    %v1470 = vmul.f32 %v1454, %v1468
    %v1471 = vmul.f32 %v1455, %v1469
    %v1473 = vlaneseq
    %v1474 = vshrl.u32 %v1473, 7
    %v1475 = vsub.s32 0, %v1474
    %v1476 = vrot.slane %v1444, %v1475
    %v1478 = vmul.f32 %v1470, %v1476
    %v1479 = vmul.f32 %v1471, %v1476
    %v1481 = vlaneseq
    %v1482 = vshrl.u32 %v1481, 7
    %v1483 = vsub.s32 0, %v1482
    %v1484 = vrot.slane %v1445, %v1483
    %v1486 = vadd.f32 %v1478, %v1484
    %v1487 = vadd.f32 %v1479, %v1484
    %v1488 = vpack.c.bf16 %v1487, %v1486
    %v1489 = vld [vmem:[%s9] sm:$0xf]
    %v1490 = vld [vmem:[%s9 + $0x4] sm:$0xf]
    %v1491 = vld [vmem:[%s9 + $0x8] sm:$0xf]
    %v1492 = vld [vmem:[%s9 + $0xc] sm:$0xf]
    %v1493 = vld [vmem:[%s10] sm:$0x1]
    %v1495 = vlaneseq
    %v1496 = vshrl.u32 %v1495, 7
    %v1497 = vsub.s32 0, %v1496
    %v1498 = vrot.slane %v1493, %v1497
    %v1504 = vunpack.c.l.b16 %v1489
    %v1505 = vunpack.c.l.b16 %v1490
    %v1506 = vunpack.c.l.b16 %v1491
    %v1507 = vunpack.c.l.b16 %v1492
    %v1508 = vpack.c.b16 %v1505, %v1504
    %v1509 = vpack.c.b16 %v1507, %v1506
    %v1513 = vsel %vm50, %v1488, 0
    %1515 = vmatprep.subr.bf16.mxu0 0
    %1516 = vmatpush1.bf16.msra.mxu0 0
    %1517 = vmatprep.subr.bf16.mxu0 0
    %1518 = vmatpush1.bf16.msra.mxu0 0
    %1519 = vmatprep.subr.bf16.mxu0 0
    %1520 = vmatpush1.bf16.msra.mxu0 0
    %1521 = vmatprep.subr.bf16.mxu0 0
    %1522 = vmatpush1.bf16.msra.mxu0 0
    %1523 = vmatprep.subr.bf16.mxu0 0
    %1524 = vmatpush1.bf16.msra.mxu0 0
    %1525 = vmatprep.subr.bf16.mxu0 0
    %1526 = vmatpush1.bf16.msra.mxu0 0
    %1527 = vmatprep.subr.bf16.mxu0 0
    %1528 = vmatpush1.bf16.msra.mxu0 %v1509
    %1529 = vmatprep.subr.bf16.mxu0 0
    %1530 = vmatpush1.bf16.msra.mxu0 %v1508
    %1531 = vmatprep.subr.bf16.mxu0 0
    %1532 = vmatpush2.bf16.msra.mxu0 0
    %1533 = vmatprep.subr.bf16.mxu0 0
    %1534 = vmatpush2.bf16.msra.mxu0 0
    %1535 = vmatprep.subr.bf16.mxu0 0
    %1536 = vmatpush2.bf16.msra.mxu0 0
    %1537 = vmatprep.subr.bf16.mxu0 0
    %1538 = vmatpush2.bf16.msra.mxu0 0
    %1539 = vmatprep.subr.bf16.mxu0 0
    %1540 = vmatpush2.bf16.msra.mxu0 0
    %1541 = vmatprep.subr.bf16.mxu0 0
    %1542 = vmatpush2.bf16.msra.mxu0 0
    %1543 = vmatprep.subr.bf16.mxu0 0
    %1544 = vmatpush2.bf16.msra.mxu0 0
    %1545 = vmatprep.subr.bf16.mxu0 0
    %1546 = vmatpush2.bf16.msra.mxu0 0
    %1547 = vmatprep.mubr.bf16.mxu0 0
    %1548 = vmatmul.mubr.bf16.gmra.mxu0 %v1513
    %v1549 = vpop.f32.mrf.mxu0
    %v1550 = vadd.f32 %v1498, %v1549
    %v1551 = vpop.f32.mrf.mxu0
    %v1552 = vpop.f32.mrf.mxu0
    %v1553 = vadd.f32 %v1498, %v1552
    %v1554 = vpop.f32.mrf.mxu0
    %1555 = vdwg.mxu0
    %v1556 = vmul.f32 %v1550, 0.5
    %v1557 = vmul.f32 %v1553, 0.5
    %v1558 = vmul.f32 %v1550, 0.044715
    %v1559 = vmul.f32 %v1553, 0.044715
    %v1560 = vmul.f32 %v1558, %v1550
    %v1561 = vmul.f32 %v1559, %v1553
    %v1562 = vmul.f32 %v1560, %v1550
    %v1563 = vmul.f32 %v1561, %v1553
    %v1564 = vadd.f32 %v1550, %v1562
    %v1565 = vadd.f32 %v1553, %v1563
    %v1566 = vmul.f32 %v1564, 0.7978846
    %v1567 = vmul.f32 %v1565, 0.7978846
    %v1568 = vtanh.pop %v1566
    %v1569 = vtanh.pop %v1567
    %v1570 = vadd.f32 %v1568, 1.0
    %v1571 = vadd.f32 %v1569, 1.0
    %v1572 = vmul.f32 %v1556, %v1570
    %v1573 = vmul.f32 %v1557, %v1571
    %v1574 = vpack.c.bf16 %v1573, %v1572
    %v1575 = vld [vmem:[%s11] sm:$0xf]
    %v1576 = vld [vmem:[%s11 + $0x4] sm:$0xf]
    %v1577 = vld [vmem:[%s11 + $0x8] sm:$0xf]
    %v1578 = vld [vmem:[%s11 + $0xc] sm:$0xf]
    %v1579 = vld [vmem:[%s11 + $0x10] sm:$0xf]
    %v1580 = vld [vmem:[%s11 + $0x14] sm:$0xf]
    %v1581 = vld [vmem:[%s11 + $0x18] sm:$0xf]
    %v1582 = vld [vmem:[%s11 + $0x1c] sm:$0xf]
    %v1583 = vld [vmem:[%s11 + $0x20] sm:$0xf]
    %v1584 = vld [vmem:[%s11 + $0x24] sm:$0xf]
    %v1585 = vld [vmem:[%s11 + $0x28] sm:$0xf]
    %v1586 = vld [vmem:[%s11 + $0x2c] sm:$0xf]
    %v1587 = vld [vmem:[%s11 + $0x30] sm:$0xf]
    %v1588 = vld [vmem:[%s11 + $0x34] sm:$0xf]
    %v1589 = vld [vmem:[%s11 + $0x38] sm:$0xf]
    %v1590 = vld [vmem:[%s11 + $0x3c] sm:$0xf]
    %v1591 = vld [vmem:[%s12] sm:$0x1]
    %v1593 = vlaneseq
    %v1594 = vshrl.u32 %v1593, 7
    %v1595 = vsub.s32 0, %v1594
    %v1596 = vrot.slane %v1591, %v1595
    %v1614 = vunpack.c.l.b16 %v1575
    %v1615 = vunpack.c.l.b16 %v1576
    %v1616 = vunpack.c.l.b16 %v1577
    %v1617 = vunpack.c.l.b16 %v1578
    %v1618 = vunpack.c.l.b16 %v1579
    %v1619 = vunpack.c.l.b16 %v1580
    %v1620 = vunpack.c.l.b16 %v1581
    %v1621 = vunpack.c.l.b16 %v1582
    %v1622 = vunpack.c.l.b16 %v1583
    %v1623 = vunpack.c.l.b16 %v1584
    %v1624 = vunpack.c.l.b16 %v1585
    %v1625 = vunpack.c.l.b16 %v1586
    %v1626 = vunpack.c.l.b16 %v1587
    %v1627 = vunpack.c.l.b16 %v1588
    %v1628 = vunpack.c.l.b16 %v1589
    %v1629 = vunpack.c.l.b16 %v1590
    %v1630 = vpack.c.b16 %v1615, %v1614
    %v1631 = vpack.c.b16 %v1617, %v1616
    %v1632 = vpack.c.b16 %v1619, %v1618
    %v1633 = vpack.c.b16 %v1621, %v1620
    %v1634 = vpack.c.b16 %v1623, %v1622
    %v1635 = vpack.c.b16 %v1625, %v1624
    %v1636 = vpack.c.b16 %v1627, %v1626
    %v1637 = vpack.c.b16 %v1629, %v1628
    %1646 = vmatprep.subr.bf16.mxu0 0
    %1647 = vmatpush1.bf16.msra.mxu0 %v1637
    %1648 = vmatprep.subr.bf16.mxu0 0
    %1649 = vmatpush1.bf16.msra.mxu0 %v1636
    %1650 = vmatprep.subr.bf16.mxu0 0
    %1651 = vmatpush1.bf16.msra.mxu0 %v1635
    %1652 = vmatprep.subr.bf16.mxu0 0
    %1653 = vmatpush1.bf16.msra.mxu0 %v1634
    %1654 = vmatprep.subr.bf16.mxu0 0
    %1655 = vmatpush1.bf16.msra.mxu0 %v1633
    %1656 = vmatprep.subr.bf16.mxu0 0
    %1657 = vmatpush1.bf16.msra.mxu0 %v1632
    %1658 = vmatprep.subr.bf16.mxu0 0
    %1659 = vmatpush1.bf16.msra.mxu0 %v1631
    %1660 = vmatprep.subr.bf16.mxu0 0
    %1661 = vmatpush1.bf16.msra.mxu0 %v1630
    %1662 = vmatprep.subr.bf16.mxu0 0
    %1663 = vmatpush2.bf16.msra.mxu0 0
    %1664 = vmatprep.subr.bf16.mxu0 0
    %1665 = vmatpush2.bf16.msra.mxu0 0
    %1666 = vmatprep.subr.bf16.mxu0 0
    %1667 = vmatpush2.bf16.msra.mxu0 0
    %1668 = vmatprep.subr.bf16.mxu0 0
    %1669 = vmatpush2.bf16.msra.mxu0 0
    %1670 = vmatprep.subr.bf16.mxu0 0
    %1671 = vmatpush2.bf16.msra.mxu0 0
    %1672 = vmatprep.subr.bf16.mxu0 0
    %1673 = vmatpush2.bf16.msra.mxu0 0
    %1674 = vmatprep.subr.bf16.mxu0 0
    %1675 = vmatpush2.bf16.msra.mxu0 0
    %1676 = vmatprep.subr.bf16.mxu0 0
    %1677 = vmatpush2.bf16.msra.mxu0 0
    %1678 = vmatprep.mubr.bf16.mxu0 0
    %1679 = vmatmul.mubr.bf16.gmra.mxu0 %v1574
    %v1680 = vpop.f32.mrf.mxu0
    %v1681 = vadd.f32 %v1596, %v1680
    %v1682 = vpop.f32.mrf.mxu0
    %v1683 = vpop.f32.mrf.mxu0
    %v1684 = vadd.f32 %v1596, %v1683
    %v1685 = vpop.f32.mrf.mxu0
    %1686 = vdwg.mxu0
    %v1687 = vadd.f32 %v1442, %v1681
    %v1688 = vadd.f32 %v1443, %v1684
    %1689 = vst.msk [vmem:[#allocation3] sm:$0xff] %vm50, %v1687
    %1690 = vst.msk [vmem:[#allocation3 + $0x8] sm:$0xff] %vm50, %v1688
    // Predicated region
    $region54: #{gpt2_block.1} parent=1 // pred_check
      _
    $region55: #{gpt2_block.1} parent=1 // pred_check_branch
      %1692 = sbr.rel (0) target = $region57
    $region56: #{gpt2_block.1} parent=1 // pred_region
      %s1694 = ssub.s32 256, 256
      %1695 = vsyncadd [#allocation4], %s1694
      %s1696 = sshll.u32 [#allocation3], 4
      %s1697 = int_to_ptr.vmem [resolvable:$true] %s1696
      %1702 = dma.vmem_to_hbm [thread:$0]  %s1697, 256, %s13, [#allocation4], 128, 128, 8
    $region57: #{gpt2_block.1} parent=1 // pred_fallthru
      _
    // Predicated region
    $region58: #{gpt2_block.1} parent=1 // pred_check
      _
    $region59: #{gpt2_block.1} parent=1 // pred_check_branch
      %1704 = sbr.rel (0) target = $region61
    $region60: #{gpt2_block.1} parent=1 // pred_region
      %1705 = dma.done [#allocation4], 256
    $region61: #{gpt2_block.1} parent=1 // pred_fallthru
      _
    %1706 = vsyncpa [#allocation4], 1

</llo_original>
